<compile_context>
chip_gen: v7x
topology: tpu7x:2x2x1
jax: 0.10.0
libtpu: 0.0.40
codegen_flags: <defaults>
</compile_context>

<pallas_src>
import jax
import jax.numpy as jnp
from jax.experimental import pallas as pl
from jax.experimental.pallas import tpu as pltpu


# --------------------------------------------------------------------------
# Tiling / compiler-parameter helpers
# --------------------------------------------------------------------------
def _pick_batch_tile(B):
    """Largest batch tile (multiple of 8, dividing B) that yields >= 4 grid
    steps (DMA pipelining), preferring an even step count (v7x megacore)."""
    cands = [bt for bt in range(8, B + 1, 8) if B % bt == 0]
    if not cands:
        return B                      # tiny batches: single tile
    preds = (lambda n: n >= 4 and n % 2 == 0,
             lambda n: n >= 4,
             lambda n: n >= 2 and n % 2 == 0,
             lambda n: n >= 2)
    for pred in preds:
        ok = [bt for bt in cands if pred(B // bt)]
        if ok:
            return max(ok)
    return B


def _vmem_limit_bytes():
    """Explicit scoped-VMEM limit with headroom, re-derived per generation
    (defaults of 16/32 MiB are too small at the real 512-channel sizes and
    v7x only has 64 MiB physical VMEM)."""
    try:
        cap = pltpu.get_tpu_info().vmem_capacity_bytes
    except Exception:
        cap = 64 * 1024 * 1024
    return max(32 * 1024 * 1024, min(cap * 3 // 4, 100 * 1024 * 1024))


# --------------------------------------------------------------------------
# One-time preprocessing (hoisted out of the per-token step)
# --------------------------------------------------------------------------
def prepare_params(params):
    """Per-model weight re-layout: transposes, bf16 casts, lane-padded out head."""
    f32, bf16 = jnp.float32, jnp.bfloat16
    H = params["emb"].shape[1]
    C = params["conv1"].shape[0]
    nclass = params["out_w"].shape[0]
    NP = ((nclass + 127) // 128) * 128          # lane-dense padded logits width
    woh = jnp.zeros((H, NP), f32).at[:, :nclass].set(params["out_w"][:, :H].T)
    woc = jnp.zeros((C, NP), f32).at[:, :nclass].set(params["out_w"][:, H:].T)
    bo = jnp.zeros((1, NP), f32).at[:, :nclass].set(params["out_b"].reshape(1, -1))
    return {
        "emb":    params["emb"].astype(bf16),
        "wih0_t": params["w_ih0"].T.astype(bf16),
        "whh0_t": params["w_hh0"].T.astype(bf16),
        "wih1_t": params["w_ih1"].T.astype(bf16),
        "whh1_t": params["w_hh1"].T.astype(bf16),
        "bih0":   params["b_ih0"].reshape(1, -1).astype(f32),
        "bhh0":   params["b_hh0"].reshape(1, -1).astype(f32),
        "bih1":   params["b_ih1"].reshape(1, -1).astype(f32),
        "bhh1":   params["b_hh1"].reshape(1, -1).astype(f32),
        "w1_t":   params["conv1"][:, :, 0, 0].T.astype(bf16),               # (H, C)
        # conv2 OIHW -> 9 taps of (C_in, C_out), tap index = dy*3 + dx.
        "w2_taps": jnp.transpose(params["conv2"], (2, 3, 1, 0))
                      .reshape(9, C, C).astype(bf16),
        "w3_row": params["conv3"][:, :, 0, 0].reshape(1, 1, C).astype(bf16),
        "woh": woh.astype(bf16),
        "woc": woc.astype(bf16),
        "bo":  bo,
    }


def prepare_feature(feature, mask):
    """Per-sequence feature re-layout: channel-last, H-padded, spatially
    flattened with a 1-row guard each end so every 3x3 tap is a constant flat
    shift.  Streamed in bf16 (all MXU consumers are bf16)."""
    B, C, Hf, Wf = feature.shape
    S = Hf * Wf
    feat_cl = jnp.transpose(feature, (0, 2, 3, 1))                    # (B,Hf,Wf,C)
    feat_hp = jnp.pad(feat_cl, ((0, 0), (1, 1), (0, 0), (0, 0)))      # H pad
    feat_pad = jnp.pad(feat_hp.reshape(B, (Hf + 2) * Wf, C),
                       ((0, 0), (1, 1), (0, 0))).astype(jnp.bfloat16)  # (B,SP,C)
    mask_col = mask.reshape(B, S, 1).astype(jnp.float32)   # tiny; f32 avoids bf16 VPU pack/unpack on v5e
    return feat_pad, mask_col


# --------------------------------------------------------------------------
# Per-token decoder step (the Pallas kernel)
# --------------------------------------------------------------------------
def decoder_step(prepped, tokens, hidden, feat_pad, mask_col, *, nclass,
                 batch_tile=None):
    """Returns (logits (B, nclass), new_hidden (2, B, H))."""
    f32, bf16 = jnp.float32, jnp.bfloat16
    B, SP, C = feat_pad.shape
    S = mask_col.shape[1]
    Wf = (SP - S - 2) // 2
    H = prepped["emb"].shape[1]
    NP = prepped["woh"].shape[1]

    BT = _pick_batch_tile(B) if batch_tile is None else batch_tile
    assert B % BT == 0 and (BT == B or BT % 8 == 0), (B, BT)
    ntiles = B // BT

    # ----------------------- kernel: one batch tile per grid step ------------
    def kernel(x_ref, h_ref,
               wih0_ref, whh0_ref, bih0_ref, bhh0_ref,
               wih1_ref, whh1_ref, bih1_ref, bhh1_ref,
               w1_ref, w2_ref, w3_ref,
               fpad_ref, mask_ref,
               woh_ref, woc_ref, bo_ref,
               out_ref, hout_ref):
        # --- 2-layer GRU, one time step, whole batch tile at once (M = BT) ---
        # TODO(synk): dropout1 (p=0.1) is identity in eval mode; no RNG dropout.
        def gru_cell(x_bf, h_f32, wih_t, whh_t, b_ih, b_hh):
            gi = jnp.dot(x_bf, wih_t[...], preferred_element_type=f32) + b_ih[...]
            gh = jnp.dot(h_f32.astype(bf16), whh_t[...],
                         preferred_element_type=f32) + b_hh[...]
            r = jax.nn.sigmoid(gi[:, 0 * H:1 * H] + gh[:, 0 * H:1 * H])
            z = jax.nn.sigmoid(gi[:, 1 * H:2 * H] + gh[:, 1 * H:2 * H])
            n = jnp.tanh(gi[:, 2 * H:3 * H] + r * gh[:, 2 * H:3 * H])
            return (1.0 - z) * n + z * h_f32

        x = x_ref[...]                                           # (BT, H) bf16
        h0n = gru_cell(x, h_ref[0], wih0_ref, whh0_ref, bih0_ref, bhh0_ref)
        h1n = gru_cell(h0n.astype(bf16), h_ref[1], wih1_ref, whh1_ref,
                       bih1_ref, bhh1_ref)
        hout_ref[0] = h0n
        hout_ref[1] = h1n

        h1b = h1n.astype(bf16)
        # conv1 (1x1) on layer-1 hidden -> per-channel additive term (BT, C).
        hc = jnp.dot(h1b, w1_ref[...], preferred_element_type=f32)

        # --- conv2 (3x3, pad 1): 9 taps, each ONE (BT*S, C)@(C, C) matmul ---
        fpad = fpad_ref[...]                                     # (BT, SP, C) bf16
        # Column masks (in padded-flat coordinates) kill the horizontal wrap of
        # the constant-shift trick (only H is zero-padded, not W).  Two masked
        # copies built once feed all dx==0 / dx==2 taps.
        colp = jax.lax.broadcasted_iota(jnp.int32, (1, SP, 1), 1) % Wf
        fpad_l = fpad * (colp != 0).astype(bf16)                 # dx == 0 taps
        fpad_r = fpad * (colp != 1).astype(bf16)                 # dx == 2 taps

        acc = jnp.zeros((BT * S, C), dtype=f32)
        for dy in range(3):
            base = dy * Wf
            for dx, src in ((0, fpad_l), (1, fpad), (2, fpad_r)):
                # TODO(synk): dx=1/2 slices are sublane-misaligned; could use
                # pltpu.roll on the sublane axis to keep every slice 8-aligned.
                slab = src[:, base + dx: base + dx + S, :]       # (BT, S, C)
                acc = acc + jnp.dot(slab.reshape(BT * S, C), w2_ref[dy * 3 + dx],
                                    preferred_element_type=f32)

        t3 = jnp.tanh(acc.reshape(BT, S, C) + hc[:, None, :])    # (BT, S, C)

        # conv3 (1x1, C -> 1) as a VPU multiply + lane reduce (keeps MXU free).
        s = jnp.sum(t3 * w3_ref[...], axis=-1, keepdims=True)    # (BT, S, 1)

        # Masked softmax over the spatial dim (same semantics as mask_softmax).
        # TODO(synk): for very large S a lane-dense (BT, S) layout would cut
        # the softmax reduction work; at these sizes it is noise.
        m = mask_ref[...]                                        # (BT, S, 1)
        e = jnp.exp(s - jnp.max(s, axis=1, keepdims=True)) * m
        inv = pl.reciprocal(jnp.sum(e, axis=1, keepdims=True), approx=True)
        w_att = e * inv + 1e-7                                   # (BT, S, 1)

        # Attention context: VPU multiply + sublane reduce over S (off the MXU).
        feat_c = fpad[:, Wf + 1: Wf + 1 + S, :]                  # unpadded (BT,S,C)
        ctx = jnp.sum(w_att * feat_c.astype(f32), axis=1)        # (BT, C)

        # Output Linear on concat([hidden[1], c]) as a split matmul; weights are
        # lane-padded to NP so the store is a full-lane slab.
        out_ref[...] = (jnp.dot(h1b, woh_ref[...], preferred_element_type=f32)
                        + jnp.dot(ctx.astype(bf16), woc_ref[...],
                                  preferred_element_type=f32)
                        + bo_ref[...])

    # ---------------------------- glue (layout only) -------------------------
    x_emb = prepped["emb"][tokens]                               # (B, H) bf16 gather
    h_in = hidden.astype(f32)                                    # (2, B, H)

    def btile(*dims):
        nd = len(dims)
        return pl.BlockSpec((BT,) + dims, lambda i, nd=nd: (i,) + (0,) * nd)

    def full(arr):
        # Grid-constant weights: single-buffer them when the grid has more than
        # one step (index_map never changes -> no DMA cost, half the VMEM).
        nd = arr.ndim
        if ntiles > 1:
            return pl.BlockSpec(arr.shape, lambda i, nd=nd: (0,) * nd,
                                pipeline_mode=pl.Buffered(1))
        return pl.BlockSpec(arr.shape, lambda i, nd=nd: (0,) * nd)

    in_specs = [
        btile(H),                                                # embedded tokens
        pl.BlockSpec((2, BT, H), lambda i: (0, i, 0)),           # GRU hidden
        full(prepped["wih0_t"]), full(prepped["whh0_t"]),
        full(prepped["bih0"]), full(prepped["bhh0"]),
        full(prepped["wih1_t"]), full(prepped["whh1_t"]),
        full(prepped["bih1"]), full(prepped["bhh1"]),
        full(prepped["w1_t"]), full(prepped["w2_taps"]), full(prepped["w3_row"]),
        btile(SP, C),                                            # padded feature (bf16)
        btile(S, 1),                                             # attention mask
        full(prepped["woh"]), full(prepped["woc"]), full(prepped["bo"]),
    ]
    out_specs = (pl.BlockSpec((BT, NP), lambda i: (i, 0)),
                 pl.BlockSpec((2, BT, H), lambda i: (0, i, 0)))
    out_shape = (jax.ShapeDtypeStruct((B, NP), f32),
                 jax.ShapeDtypeStruct((2, B, H), f32))

    logits_pad, h_new = pl.pallas_call(
        kernel,
        grid=(ntiles,),
        in_specs=in_specs,
        out_specs=out_specs,
        out_shape=out_shape,
        # Recurrent hidden state updated in place (input 1 -> output 1).
        input_output_aliases={1: 1},
        compiler_params=pltpu.CompilerParams(
            dimension_semantics=("parallel",),
            vmem_limit_bytes=_vmem_limit_bytes()),
    )(x_emb, h_in,
      prepped["wih0_t"], prepped["whh0_t"], prepped["bih0"], prepped["bhh0"],
      prepped["wih1_t"], prepped["whh1_t"], prepped["bih1"], prepped["bhh1"],
      prepped["w1_t"], prepped["w2_taps"], prepped["w3_row"],
      feat_pad, mask_col,
      prepped["woh"], prepped["woc"], prepped["bo"])

    return logits_pad[:, :nclass], h_new


def decoder_forward(params, tokens, hidden, feature, mask, *, batch_tile=None):
    """Convenience single-call wrapper (prep + step). In a decode loop, call
    prepare_params / prepare_feature once and decoder_step per token."""
    prepped = prepare_params(params)
    feat_pad, mask_col = prepare_feature(feature, mask)
    return decoder_step(prepped, tokens, hidden, feat_pad, mask_col,
                        nclass=params["out_w"].shape[0], batch_tile=batch_tile)


# --------------------------------------------------------------------------
# Pure-JAX reference (mirrors the PyTorch forward, eval mode)
# --------------------------------------------------------------------------
def _ref_forward(params, tokens, hidden, feature, mask):
    H = params["emb"].shape[1]
    emb = params["emb"][tokens]

    def gru(x, h, wih, whh, bih, bhh):
        gi = x @ wih.T + bih
        gh = h @ whh.T + bhh
        r = jax.nn.sigmoid(gi[:, :H] + gh[:, :H])
        z = jax.nn.sigmoid(gi[:, H:2 * H] + gh[:, H:2 * H])
        n = jnp.tanh(gi[:, 2 * H:] + r * gh[:, 2 * H:])
        return (1.0 - z) * n + z * h

    h0n = gru(emb, hidden[0], params["w_ih0"], params["w_hh0"],
              params["b_ih0"], params["b_hh0"])
    h1n = gru(h0n, hidden[1], params["w_ih1"], params["w_hh1"],
              params["b_ih1"], params["b_hh1"])
    hidden_new = jnp.stack([h0n, h1n])

    B, C, Hf, Wf = feature.shape
    hc = h1n @ params["conv1"][:, :, 0, 0].T                                 # (B, C)
    enc = jax.lax.conv_general_dilated(
        feature, params["conv2"], (1, 1), ((1, 1), (1, 1)),
        dimension_numbers=("NCHW", "OIHW", "NCHW"))
    t = jnp.tanh(enc + hc[:, :, None, None])
    sc = jax.lax.conv_general_dilated(
        t, params["conv3"], (1, 1), ((0, 0), (0, 0)),
        dimension_numbers=("NCHW", "OIHW", "NCHW")).reshape(B, 1, -1)
    m = mask.reshape(B, 1, -1).astype(jnp.float32)
    e = jnp.exp(sc - jnp.max(sc, axis=2, keepdims=True)) * m
    w = e / jnp.sum(e, axis=2, keepdims=True) + 1e-7
    c = jnp.sum(feature.reshape(B, C, -1) * w, axis=2)
    out = (jnp.concatenate([h1n, c], axis=1) @ params["out_w"].T
           + params["out_b"].reshape(1, -1))
    return out, hidden_new


if __name__ == "__main__":
    key = jax.random.PRNGKey(0)
    # Small, self-consistent sizes (nh == conv/feature channels).
    B, H, V = 2, 32, 12           # batch, hidden_size (nh), nclass
    C, Hf, Wf = H, 4, 8           # feature channels / spatial

    ks = jax.random.split(key, 17)

    def init(k, shape, scale=0.1):
        return jax.random.normal(k, shape, dtype=jnp.float32) * scale

    params = {
        "emb":   init(ks[0], (V, H)),
        "w_ih0": init(ks[1], (3 * H, H)),
        "w_hh0": init(ks[2], (3 * H, H)),
        "b_ih0": init(ks[3], (1, 3 * H)),
        "b_hh0": init(ks[4], (1, 3 * H)),
        "w_ih1": init(ks[5], (3 * H, H)),
        "w_hh1": init(ks[6], (3 * H, H)),
        "b_ih1": init(ks[7], (1, 3 * H)),
        "b_hh1": init(ks[8], (1, 3 * H)),
        "conv1": init(ks[9], (C, H, 1, 1)),
        "conv2": init(ks[10], (C, C, 3, 3)),
        "conv3": init(ks[11], (1, C, 1, 1)),
        "out_w": init(ks[12], (V, H + C)),
        "out_b": init(ks[13], (1, V)),
    }
    tokens = jnp.array([1, 5], dtype=jnp.int32)
    hidden = init(ks[14], (2, B, H), 1.0)
    feature = init(ks[15], (B, C, Hf, Wf), 1.0)
    mask = jnp.ones((B, 1, Hf, Wf), dtype=jnp.float32).at[:, :, :, Wf - 2:].set(0.0)

    # Hoisted preprocessing (once per model / sequence), Pallas step per token.
    prepped = prepare_params(params)
    feat_pad, mask_col = prepare_feature(feature, mask)
    step = jax.jit(decoder_step, static_argnames=("nclass", "batch_tile"))
    out, h_new = step(prepped, tokens, hidden, feat_pad, mask_col, nclass=V)
    out = jax.block_until_ready(out)
    h_new = jax.block_until_ready(h_new)

    ref_out, ref_h = _ref_forward(params, tokens, hidden, feature, mask)
    # bf16 MXU operands with f32 accumulation -> compare at bf16-level tolerance.
    assert jnp.allclose(out, ref_out, atol=3e-2, rtol=3e-2), "output mismatch"
    assert jnp.allclose(h_new, ref_h, atol=3e-2, rtol=3e-2), "hidden mismatch"
    print("KERNEL_OK")
</pallas_src>

<mosaic_0001>
module attributes {stable_mosaic.version = 11 : i64} {
  func.func @kernel(%arg0: i32, %arg1: memref<2x32xbf16, #tpu.memory_space<vmem>>, %arg2: memref<2x2x32xf32, #tpu.memory_space<vmem>>, %arg3: memref<32x96xbf16, #tpu.memory_space<vmem>>, %arg4: memref<32x96xbf16, #tpu.memory_space<vmem>>, %arg5: memref<1x96xf32, #tpu.memory_space<vmem>>, %arg6: memref<1x96xf32, #tpu.memory_space<vmem>>, %arg7: memref<32x96xbf16, #tpu.memory_space<vmem>>, %arg8: memref<32x96xbf16, #tpu.memory_space<vmem>>, %arg9: memref<1x96xf32, #tpu.memory_space<vmem>>, %arg10: memref<1x96xf32, #tpu.memory_space<vmem>>, %arg11: memref<32x32xbf16, #tpu.memory_space<vmem>>, %arg12: memref<9x32x32xbf16, #tpu.memory_space<vmem>>, %arg13: memref<1x1x32xbf16, #tpu.memory_space<vmem>>, %arg14: memref<2x50x32xbf16, #tpu.memory_space<vmem>>, %arg15: memref<2x32x1xf32, #tpu.memory_space<vmem>>, %arg16: memref<32x128xbf16, #tpu.memory_space<vmem>>, %arg17: memref<32x128xbf16, #tpu.memory_space<vmem>>, %arg18: memref<1x128xf32, #tpu.memory_space<vmem>>, %arg19: memref<2x128xf32, #tpu.memory_space<vmem>>, %arg20: memref<2x2x32xf32, #tpu.memory_space<vmem>>) attributes {dimension_semantics = [#tpu.dimension_semantics<parallel>], iteration_bounds = array<i64: 1>, scalar_prefetch = 0 : i64, scratch_operands = 0 : i64, tpu.core_type = #tpu.core_type<tc>, window_params = [{transform_indices = @transform_0, window_bounds = array<i64: 2, 32>}, {transform_indices = @transform_1, window_bounds = array<i64: 2, 2, 32>}, {pipeline_mode = #tpu.pipeline_mode<synchronous>, transform_indices = @transform_2, window_bounds = array<i64: 32, 96>}, {pipeline_mode = #tpu.pipeline_mode<synchronous>, transform_indices = @transform_3, window_bounds = array<i64: 32, 96>}, {pipeline_mode = #tpu.pipeline_mode<synchronous>, transform_indices = @transform_4, window_bounds = array<i64: 1, 96>}, {pipeline_mode = #tpu.pipeline_mode<synchronous>, transform_indices = @transform_5, window_bounds = array<i64: 1, 96>}, {pipeline_mode = #tpu.pipeline_mode<synchronous>, transform_indices = @transform_6, window_bounds = array<i64: 32, 96>}, {pipeline_mode = #tpu.pipeline_mode<synchronous>, transform_indices = @transform_7, window_bounds = array<i64: 32, 96>}, {pipeline_mode = #tpu.pipeline_mode<synchronous>, transform_indices = @transform_8, window_bounds = array<i64: 1, 96>}, {pipeline_mode = #tpu.pipeline_mode<synchronous>, transform_indices = @transform_9, window_bounds = array<i64: 1, 96>}, {pipeline_mode = #tpu.pipeline_mode<synchronous>, transform_indices = @transform_10, window_bounds = array<i64: 32, 32>}, {pipeline_mode = #tpu.pipeline_mode<synchronous>, transform_indices = @transform_11, window_bounds = array<i64: 9, 32, 32>}, {pipeline_mode = #tpu.pipeline_mode<synchronous>, transform_indices = @transform_12, window_bounds = array<i64: 1, 1, 32>}, {transform_indices = @transform_13, window_bounds = array<i64: 2, 50, 32>}, {transform_indices = @transform_14, window_bounds = array<i64: 2, 32, 1>}, {pipeline_mode = #tpu.pipeline_mode<synchronous>, transform_indices = @transform_15, window_bounds = array<i64: 32, 128>}, {pipeline_mode = #tpu.pipeline_mode<synchronous>, transform_indices = @transform_16, window_bounds = array<i64: 32, 128>}, {pipeline_mode = #tpu.pipeline_mode<synchronous>, transform_indices = @transform_17, window_bounds = array<i64: 1, 128>}, {transform_indices = @transform_18, window_bounds = array<i64: 2, 128>}, {transform_indices = @transform_19, window_bounds = array<i64: 2, 2, 32>}]} {
    %c0 = arith.constant 0 : index
    %c0_0 = arith.constant 0 : index
    %0 = vector.load %arg1[%c0, %c0_0] : memref<2x32xbf16, #tpu.memory_space<vmem>>, vector<2x32xbf16>
    %c0_1 = arith.constant 0 : index
    %c0_2 = arith.constant 0 : index
    %c0_3 = arith.constant 0 : index
    %1 = vector.load %arg2[%c0_1, %c0_2, %c0_3] : memref<2x2x32xf32, #tpu.memory_space<vmem>>, vector<1x2x32xf32>
    %2 = vector.shape_cast %1 : vector<1x2x32xf32> to vector<2x32xf32>
    %c0_4 = arith.constant 0 : index
    %c0_5 = arith.constant 0 : index
    %3 = vector.load %arg3[%c0_4, %c0_5] : memref<32x96xbf16, #tpu.memory_space<vmem>>, vector<32x96xbf16>
    %cst = arith.constant dense<0.000000e+00> : vector<2x96xf32>
    %4 = tpu.matmul %0, %3, %cst {dimension_numbers = #tpu.dot_dimension_numbers<[1], [0], [0], [1], [0, 0, 1, 1], [], []>} : vector<2x32xbf16>, vector<32x96xbf16>, vector<2x96xf32> -> vector<2x96xf32>
    %c0_6 = arith.constant 0 : index
    %c0_7 = arith.constant 0 : index
    %5 = vector.load %arg5[%c0_6, %c0_7] : memref<1x96xf32, #tpu.memory_space<vmem>>, vector<1x96xf32>
    %6 = vector.broadcast %5 : vector<1x96xf32> to vector<2x96xf32>
    %7 = arith.addf %4, %6 : vector<2x96xf32>
    %8 = arith.truncf %2 : vector<2x32xf32> to vector<2x32xbf16>
    %c0_8 = arith.constant 0 : index
    %c0_9 = arith.constant 0 : index
    %9 = vector.load %arg4[%c0_8, %c0_9] : memref<32x96xbf16, #tpu.memory_space<vmem>>, vector<32x96xbf16>
    %cst_10 = arith.constant dense<0.000000e+00> : vector<2x96xf32>
    %10 = tpu.matmul %8, %9, %cst_10 {dimension_numbers = #tpu.dot_dimension_numbers<[1], [0], [0], [1], [0, 0, 1, 1], [], []>} : vector<2x32xbf16>, vector<32x96xbf16>, vector<2x96xf32> -> vector<2x96xf32>
    %c0_11 = arith.constant 0 : index
    %c0_12 = arith.constant 0 : index
    %11 = vector.load %arg6[%c0_11, %c0_12] : memref<1x96xf32, #tpu.memory_space<vmem>>, vector<1x96xf32>
    %12 = vector.broadcast %11 : vector<1x96xf32> to vector<2x96xf32>
    %13 = arith.addf %10, %12 : vector<2x96xf32>
    %14 = vector.extract_strided_slice %7 {offsets = [0, 0], sizes = [2, 32], strides = [1, 1]} : vector<2x96xf32> to vector<2x32xf32>
    %15 = vector.extract_strided_slice %13 {offsets = [0, 0], sizes = [2, 32], strides = [1, 1]} : vector<2x96xf32> to vector<2x32xf32>
    %16 = arith.addf %14, %15 : vector<2x32xf32>
    %17 = arith.negf %16 : vector<2x32xf32>
    %18 = math.exp %17 : vector<2x32xf32>
    %cst_13 = arith.constant 1.000000e+00 : f32
    %19 = vector.broadcast %cst_13 : f32 to vector<2x32xf32>
    %20 = arith.addf %19, %18 : vector<2x32xf32>
    %21 = arith.divf %19, %20 : vector<2x32xf32>
    %22 = vector.extract_strided_slice %7 {offsets = [0, 32], sizes = [2, 32], strides = [1, 1]} : vector<2x96xf32> to vector<2x32xf32>
    %23 = vector.extract_strided_slice %13 {offsets = [0, 32], sizes = [2, 32], strides = [1, 1]} : vector<2x96xf32> to vector<2x32xf32>
    %24 = arith.addf %22, %23 : vector<2x32xf32>
    %25 = arith.negf %24 : vector<2x32xf32>
    %26 = math.exp %25 : vector<2x32xf32>
    %cst_14 = arith.constant 1.000000e+00 : f32
    %27 = vector.broadcast %cst_14 : f32 to vector<2x32xf32>
    %28 = arith.addf %27, %26 : vector<2x32xf32>
    %29 = arith.divf %27, %28 : vector<2x32xf32>
    %30 = vector.extract_strided_slice %7 {offsets = [0, 64], sizes = [2, 32], strides = [1, 1]} : vector<2x96xf32> to vector<2x32xf32>
    %31 = vector.extract_strided_slice %13 {offsets = [0, 64], sizes = [2, 32], strides = [1, 1]} : vector<2x96xf32> to vector<2x32xf32>
    %32 = arith.mulf %21, %31 : vector<2x32xf32>
    %33 = arith.addf %30, %32 : vector<2x32xf32>
    %34 = math.tanh %33 : vector<2x32xf32>
    %cst_15 = arith.constant 1.000000e+00 : f32
    %35 = vector.broadcast %cst_15 : f32 to vector<2x32xf32>
    %36 = arith.subf %35, %29 : vector<2x32xf32>
    %37 = arith.mulf %36, %34 : vector<2x32xf32>
    %38 = arith.mulf %29, %2 : vector<2x32xf32>
    %39 = arith.addf %37, %38 : vector<2x32xf32>
    %40 = arith.truncf %39 : vector<2x32xf32> to vector<2x32xbf16>
    %c1 = arith.constant 1 : index
    %c0_16 = arith.constant 0 : index
    %c0_17 = arith.constant 0 : index
    %41 = vector.load %arg2[%c1, %c0_16, %c0_17] : memref<2x2x32xf32, #tpu.memory_space<vmem>>, vector<1x2x32xf32>
    %42 = vector.shape_cast %41 : vector<1x2x32xf32> to vector<2x32xf32>
    %c0_18 = arith.constant 0 : index
    %c0_19 = arith.constant 0 : index
    %43 = vector.load %arg7[%c0_18, %c0_19] : memref<32x96xbf16, #tpu.memory_space<vmem>>, vector<32x96xbf16>
    %cst_20 = arith.constant dense<0.000000e+00> : vector<2x96xf32>
    %44 = tpu.matmul %40, %43, %cst_20 {dimension_numbers = #tpu.dot_dimension_numbers<[1], [0], [0], [1], [0, 0, 1, 1], [], []>} : vector<2x32xbf16>, vector<32x96xbf16>, vector<2x96xf32> -> vector<2x96xf32>
    %c0_21 = arith.constant 0 : index
    %c0_22 = arith.constant 0 : index
    %45 = vector.load %arg9[%c0_21, %c0_22] : memref<1x96xf32, #tpu.memory_space<vmem>>, vector<1x96xf32>
    %46 = vector.broadcast %45 : vector<1x96xf32> to vector<2x96xf32>
    %47 = arith.addf %44, %46 : vector<2x96xf32>
    %48 = arith.truncf %42 : vector<2x32xf32> to vector<2x32xbf16>
    %c0_23 = arith.constant 0 : index
    %c0_24 = arith.constant 0 : index
    %49 = vector.load %arg8[%c0_23, %c0_24] : memref<32x96xbf16, #tpu.memory_space<vmem>>, vector<32x96xbf16>
    %cst_25 = arith.constant dense<0.000000e+00> : vector<2x96xf32>
    %50 = tpu.matmul %48, %49, %cst_25 {dimension_numbers = #tpu.dot_dimension_numbers<[1], [0], [0], [1], [0, 0, 1, 1], [], []>} : vector<2x32xbf16>, vector<32x96xbf16>, vector<2x96xf32> -> vector<2x96xf32>
    %c0_26 = arith.constant 0 : index
    %c0_27 = arith.constant 0 : index
    %51 = vector.load %arg10[%c0_26, %c0_27] : memref<1x96xf32, #tpu.memory_space<vmem>>, vector<1x96xf32>
    %52 = vector.broadcast %51 : vector<1x96xf32> to vector<2x96xf32>
    %53 = arith.addf %50, %52 : vector<2x96xf32>
    %54 = vector.extract_strided_slice %47 {offsets = [0, 0], sizes = [2, 32], strides = [1, 1]} : vector<2x96xf32> to vector<2x32xf32>
    %55 = vector.extract_strided_slice %53 {offsets = [0, 0], sizes = [2, 32], strides = [1, 1]} : vector<2x96xf32> to vector<2x32xf32>
    %56 = arith.addf %54, %55 : vector<2x32xf32>
    %57 = arith.negf %56 : vector<2x32xf32>
    %58 = math.exp %57 : vector<2x32xf32>
    %cst_28 = arith.constant 1.000000e+00 : f32
    %59 = vector.broadcast %cst_28 : f32 to vector<2x32xf32>
    %60 = arith.addf %59, %58 : vector<2x32xf32>
    %61 = arith.divf %59, %60 : vector<2x32xf32>
    %62 = vector.extract_strided_slice %47 {offsets = [0, 32], sizes = [2, 32], strides = [1, 1]} : vector<2x96xf32> to vector<2x32xf32>
    %63 = vector.extract_strided_slice %53 {offsets = [0, 32], sizes = [2, 32], strides = [1, 1]} : vector<2x96xf32> to vector<2x32xf32>
    %64 = arith.addf %62, %63 : vector<2x32xf32>
    %65 = arith.negf %64 : vector<2x32xf32>
    %66 = math.exp %65 : vector<2x32xf32>
    %cst_29 = arith.constant 1.000000e+00 : f32
    %67 = vector.broadcast %cst_29 : f32 to vector<2x32xf32>
    %68 = arith.addf %67, %66 : vector<2x32xf32>
    %69 = arith.divf %67, %68 : vector<2x32xf32>
    %70 = vector.extract_strided_slice %47 {offsets = [0, 64], sizes = [2, 32], strides = [1, 1]} : vector<2x96xf32> to vector<2x32xf32>
    %71 = vector.extract_strided_slice %53 {offsets = [0, 64], sizes = [2, 32], strides = [1, 1]} : vector<2x96xf32> to vector<2x32xf32>
    %72 = arith.mulf %61, %71 : vector<2x32xf32>
    %73 = arith.addf %70, %72 : vector<2x32xf32>
    %74 = math.tanh %73 : vector<2x32xf32>
    %cst_30 = arith.constant 1.000000e+00 : f32
    %75 = vector.broadcast %cst_30 : f32 to vector<2x32xf32>
    %76 = arith.subf %75, %69 : vector<2x32xf32>
    %77 = arith.mulf %76, %74 : vector<2x32xf32>
    %78 = arith.mulf %69, %42 : vector<2x32xf32>
    %79 = arith.addf %77, %78 : vector<2x32xf32>
    %c0_31 = arith.constant 0 : index
    %c0_32 = arith.constant 0 : index
    %c0_33 = arith.constant 0 : index
    %80 = vector.load %arg20[%c0_31, %c0_32, %c0_33] : memref<2x2x32xf32, #tpu.memory_space<vmem>>, vector<1x2x32xf32>
    %81 = vector.shape_cast %80 : vector<1x2x32xf32> to vector<2x32xf32>
    %82 = vector.shape_cast %39 : vector<2x32xf32> to vector<1x2x32xf32>
    tpu.vector_store %arg20[%c0_31, %c0_32, %c0_33], %82 {strides = array<i32>} : memref<2x2x32xf32, #tpu.memory_space<vmem>>, vector<1x2x32xf32>,
    %c1_34 = arith.constant 1 : index
    %c0_35 = arith.constant 0 : index
    %c0_36 = arith.constant 0 : index
    %83 = vector.load %arg20[%c1_34, %c0_35, %c0_36] : memref<2x2x32xf32, #tpu.memory_space<vmem>>, vector<1x2x32xf32>
    %84 = vector.shape_cast %83 : vector<1x2x32xf32> to vector<2x32xf32>
    %85 = vector.shape_cast %79 : vector<2x32xf32> to vector<1x2x32xf32>
    tpu.vector_store %arg20[%c1_34, %c0_35, %c0_36], %85 {strides = array<i32>} : memref<2x2x32xf32, #tpu.memory_space<vmem>>, vector<1x2x32xf32>,
    %86 = arith.truncf %79 : vector<2x32xf32> to vector<2x32xbf16>
    %c0_37 = arith.constant 0 : index
    %c0_38 = arith.constant 0 : index
    %87 = vector.load %arg11[%c0_37, %c0_38] : memref<32x32xbf16, #tpu.memory_space<vmem>>, vector<32x32xbf16>
    %cst_39 = arith.constant dense<0.000000e+00> : vector<2x32xf32>
    %88 = tpu.matmul %86, %87, %cst_39 {dimension_numbers = #tpu.dot_dimension_numbers<[1], [0], [0], [1], [0, 0, 1, 1], [], []>} : vector<2x32xbf16>, vector<32x32xbf16>, vector<2x32xf32> -> vector<2x32xf32>
    %c0_40 = arith.constant 0 : index
    %c0_41 = arith.constant 0 : index
    %c0_42 = arith.constant 0 : index
    %89 = vector.load %arg14[%c0_40, %c0_41, %c0_42] : memref<2x50x32xbf16, #tpu.memory_space<vmem>>, vector<2x50x32xbf16>
    %90 = tpu.iota {dimensions = array<i32: 1>} : vector<1x50x1xi32>
    %c8_i32 = arith.constant 8 : i32
    %c0_i32 = arith.constant 0 : i32
    %91 = arith.cmpi eq, %c8_i32, %c0_i32 : i32
    %c1_i32 = arith.constant 1 : i32
    %92 = arith.select %91, %c1_i32, %c8_i32 : i32
    %93 = vector.broadcast %92 : i32 to vector<1x50x1xi32>
    %94 = arith.remsi %90, %93 : vector<1x50x1xi32>
    %c0_i32_43 = arith.constant 0 : i32
    %95 = vector.broadcast %c0_i32_43 : i32 to vector<1x50x1xi32>
    %96 = arith.cmpi ne, %94, %95 : vector<1x50x1xi32>
    %c0_i32_44 = arith.constant 0 : i32
    %97 = vector.broadcast %c0_i32_44 : i32 to vector<1x50x1xi32>
    %98 = arith.cmpi slt, %94, %97 : vector<1x50x1xi32>
    %c0_i32_45 = arith.constant 0 : i32
    %99 = arith.cmpi slt, %92, %c0_i32_45 : i32
    %100 = vector.broadcast %99 : i1 to vector<1x50x1xi1>
    %101 = vector.broadcast %100 : vector<1x50x1xi1> to vector<1x50x1xi1>
    %102 = arith.xori %98, %101 : vector<1x50x1xi1>
    %103 = arith.andi %102, %96 : vector<1x50x1xi1>
    %104 = vector.broadcast %92 : i32 to vector<1x50x1xi32>
    %105 = arith.addi %94, %104 : vector<1x50x1xi32>
    %106 = arith.select %103, %105, %94 : vector<1x50x1xi1>, vector<1x50x1xi32>
    %c0_i32_46 = arith.constant 0 : i32
    %107 = vector.broadcast %c0_i32_46 : i32 to vector<1x50x1xi32>
    %108 = arith.cmpi ne, %106, %107 : vector<1x50x1xi32>
    %109 = arith.extui %108 : vector<1x50x1xi1> to vector<1x50x1xi32>
    %110 = arith.sitofp %109 : vector<1x50x1xi32> to vector<1x50x1xf32>
    %111 = arith.truncf %110 : vector<1x50x1xf32> to vector<1x50x1xbf16>
    %112 = vector.broadcast %111 : vector<1x50x1xbf16> to vector<2x50x32xbf16>
    %113 = arith.mulf %89, %112 : vector<2x50x32xbf16>
    %c1_i32_47 = arith.constant 1 : i32
    %114 = vector.broadcast %c1_i32_47 : i32 to vector<1x50x1xi32>
    %115 = arith.cmpi ne, %106, %114 : vector<1x50x1xi32>
    %116 = arith.extui %115 : vector<1x50x1xi1> to vector<1x50x1xi32>
    %117 = arith.sitofp %116 : vector<1x50x1xi32> to vector<1x50x1xf32>
    %118 = arith.truncf %117 : vector<1x50x1xf32> to vector<1x50x1xbf16>
    %119 = vector.broadcast %118 : vector<1x50x1xbf16> to vector<2x50x32xbf16>
    %120 = arith.mulf %89, %119 : vector<2x50x32xbf16>
    %cst_48 = arith.constant 0.000000e+00 : f32
    %121 = vector.broadcast %cst_48 : f32 to vector<64x32xf32>
    %122 = vector.extract_strided_slice %113 {offsets = [0, 0, 0], sizes = [2, 32, 32], strides = [1, 1, 1]} : vector<2x50x32xbf16> to vector<2x32x32xbf16>
    %123 = vector.shape_cast %122 : vector<2x32x32xbf16> to vector<64x32xbf16>
    %c0_49 = arith.constant 0 : index
    %c0_50 = arith.constant 0 : index
    %c0_51 = arith.constant 0 : index
    %124 = vector.load %arg12[%c0_49, %c0_50, %c0_51] : memref<9x32x32xbf16, #tpu.memory_space<vmem>>, vector<1x32x32xbf16>
    %125 = vector.shape_cast %124 : vector<1x32x32xbf16> to vector<32x32xbf16>
    %cst_52 = arith.constant dense<0.000000e+00> : vector<64x32xf32>
    %126 = tpu.matmul %123, %125, %cst_52 {dimension_numbers = #tpu.dot_dimension_numbers<[1], [0], [0], [1], [0, 0, 1, 1], [], []>} : vector<64x32xbf16>, vector<32x32xbf16>, vector<64x32xf32> -> vector<64x32xf32>
    %127 = arith.addf %121, %126 : vector<64x32xf32>
    %128 = vector.extract_strided_slice %89 {offsets = [0, 1, 0], sizes = [2, 32, 32], strides = [1, 1, 1]} : vector<2x50x32xbf16> to vector<2x32x32xbf16>
    %129 = vector.shape_cast %128 : vector<2x32x32xbf16> to vector<64x32xbf16>
    %c1_53 = arith.constant 1 : index
    %c0_54 = arith.constant 0 : index
    %c0_55 = arith.constant 0 : index
    %130 = vector.load %arg12[%c1_53, %c0_54, %c0_55] : memref<9x32x32xbf16, #tpu.memory_space<vmem>>, vector<1x32x32xbf16>
    %131 = vector.shape_cast %130 : vector<1x32x32xbf16> to vector<32x32xbf16>
    %cst_56 = arith.constant dense<0.000000e+00> : vector<64x32xf32>
    %132 = tpu.matmul %129, %131, %cst_56 {dimension_numbers = #tpu.dot_dimension_numbers<[1], [0], [0], [1], [0, 0, 1, 1], [], []>} : vector<64x32xbf16>, vector<32x32xbf16>, vector<64x32xf32> -> vector<64x32xf32>
    %133 = arith.addf %127, %132 : vector<64x32xf32>
    %134 = vector.extract_strided_slice %120 {offsets = [0, 2, 0], sizes = [2, 32, 32], strides = [1, 1, 1]} : vector<2x50x32xbf16> to vector<2x32x32xbf16>
    %135 = vector.shape_cast %134 : vector<2x32x32xbf16> to vector<64x32xbf16>
    %c2 = arith.constant 2 : index
    %c0_57 = arith.constant 0 : index
    %c0_58 = arith.constant 0 : index
    %136 = vector.load %arg12[%c2, %c0_57, %c0_58] : memref<9x32x32xbf16, #tpu.memory_space<vmem>>, vector<1x32x32xbf16>
    %137 = vector.shape_cast %136 : vector<1x32x32xbf16> to vector<32x32xbf16>
    %cst_59 = arith.constant dense<0.000000e+00> : vector<64x32xf32>
    %138 = tpu.matmul %135, %137, %cst_59 {dimension_numbers = #tpu.dot_dimension_numbers<[1], [0], [0], [1], [0, 0, 1, 1], [], []>} : vector<64x32xbf16>, vector<32x32xbf16>, vector<64x32xf32> -> vector<64x32xf32>
    %139 = arith.addf %133, %138 : vector<64x32xf32>
    %140 = vector.extract_strided_slice %113 {offsets = [0, 8, 0], sizes = [2, 32, 32], strides = [1, 1, 1]} : vector<2x50x32xbf16> to vector<2x32x32xbf16>
    %141 = vector.shape_cast %140 : vector<2x32x32xbf16> to vector<64x32xbf16>
    %c3 = arith.constant 3 : index
    %c0_60 = arith.constant 0 : index
    %c0_61 = arith.constant 0 : index
    %142 = vector.load %arg12[%c3, %c0_60, %c0_61] : memref<9x32x32xbf16, #tpu.memory_space<vmem>>, vector<1x32x32xbf16>
    %143 = vector.shape_cast %142 : vector<1x32x32xbf16> to vector<32x32xbf16>
    %cst_62 = arith.constant dense<0.000000e+00> : vector<64x32xf32>
    %144 = tpu.matmul %141, %143, %cst_62 {dimension_numbers = #tpu.dot_dimension_numbers<[1], [0], [0], [1], [0, 0, 1, 1], [], []>} : vector<64x32xbf16>, vector<32x32xbf16>, vector<64x32xf32> -> vector<64x32xf32>
    %145 = arith.addf %139, %144 : vector<64x32xf32>
    %146 = vector.extract_strided_slice %89 {offsets = [0, 9, 0], sizes = [2, 32, 32], strides = [1, 1, 1]} : vector<2x50x32xbf16> to vector<2x32x32xbf16>
    %147 = vector.shape_cast %146 : vector<2x32x32xbf16> to vector<64x32xbf16>
    %c4 = arith.constant 4 : index
    %c0_63 = arith.constant 0 : index
    %c0_64 = arith.constant 0 : index
    %148 = vector.load %arg12[%c4, %c0_63, %c0_64] : memref<9x32x32xbf16, #tpu.memory_space<vmem>>, vector<1x32x32xbf16>
    %149 = vector.shape_cast %148 : vector<1x32x32xbf16> to vector<32x32xbf16>
    %cst_65 = arith.constant dense<0.000000e+00> : vector<64x32xf32>
    %150 = tpu.matmul %147, %149, %cst_65 {dimension_numbers = #tpu.dot_dimension_numbers<[1], [0], [0], [1], [0, 0, 1, 1], [], []>} : vector<64x32xbf16>, vector<32x32xbf16>, vector<64x32xf32> -> vector<64x32xf32>
    %151 = arith.addf %145, %150 : vector<64x32xf32>
    %152 = vector.extract_strided_slice %120 {offsets = [0, 10, 0], sizes = [2, 32, 32], strides = [1, 1, 1]} : vector<2x50x32xbf16> to vector<2x32x32xbf16>
    %153 = vector.shape_cast %152 : vector<2x32x32xbf16> to vector<64x32xbf16>
    %c5 = arith.constant 5 : index
    %c0_66 = arith.constant 0 : index
    %c0_67 = arith.constant 0 : index
    %154 = vector.load %arg12[%c5, %c0_66, %c0_67] : memref<9x32x32xbf16, #tpu.memory_space<vmem>>, vector<1x32x32xbf16>
    %155 = vector.shape_cast %154 : vector<1x32x32xbf16> to vector<32x32xbf16>
    %cst_68 = arith.constant dense<0.000000e+00> : vector<64x32xf32>
    %156 = tpu.matmul %153, %155, %cst_68 {dimension_numbers = #tpu.dot_dimension_numbers<[1], [0], [0], [1], [0, 0, 1, 1], [], []>} : vector<64x32xbf16>, vector<32x32xbf16>, vector<64x32xf32> -> vector<64x32xf32>
    %157 = arith.addf %151, %156 : vector<64x32xf32>
    %158 = vector.extract_strided_slice %113 {offsets = [0, 16, 0], sizes = [2, 32, 32], strides = [1, 1, 1]} : vector<2x50x32xbf16> to vector<2x32x32xbf16>
    %159 = vector.shape_cast %158 : vector<2x32x32xbf16> to vector<64x32xbf16>
    %c6 = arith.constant 6 : index
    %c0_69 = arith.constant 0 : index
    %c0_70 = arith.constant 0 : index
    %160 = vector.load %arg12[%c6, %c0_69, %c0_70] : memref<9x32x32xbf16, #tpu.memory_space<vmem>>, vector<1x32x32xbf16>
    %161 = vector.shape_cast %160 : vector<1x32x32xbf16> to vector<32x32xbf16>
    %cst_71 = arith.constant dense<0.000000e+00> : vector<64x32xf32>
    %162 = tpu.matmul %159, %161, %cst_71 {dimension_numbers = #tpu.dot_dimension_numbers<[1], [0], [0], [1], [0, 0, 1, 1], [], []>} : vector<64x32xbf16>, vector<32x32xbf16>, vector<64x32xf32> -> vector<64x32xf32>
    %163 = arith.addf %157, %162 : vector<64x32xf32>
    %164 = vector.extract_strided_slice %89 {offsets = [0, 17, 0], sizes = [2, 32, 32], strides = [1, 1, 1]} : vector<2x50x32xbf16> to vector<2x32x32xbf16>
    %165 = vector.shape_cast %164 : vector<2x32x32xbf16> to vector<64x32xbf16>
    %c7 = arith.constant 7 : index
    %c0_72 = arith.constant 0 : index
    %c0_73 = arith.constant 0 : index
    %166 = vector.load %arg12[%c7, %c0_72, %c0_73] : memref<9x32x32xbf16, #tpu.memory_space<vmem>>, vector<1x32x32xbf16>
    %167 = vector.shape_cast %166 : vector<1x32x32xbf16> to vector<32x32xbf16>
    %cst_74 = arith.constant dense<0.000000e+00> : vector<64x32xf32>
    %168 = tpu.matmul %165, %167, %cst_74 {dimension_numbers = #tpu.dot_dimension_numbers<[1], [0], [0], [1], [0, 0, 1, 1], [], []>} : vector<64x32xbf16>, vector<32x32xbf16>, vector<64x32xf32> -> vector<64x32xf32>
    %169 = arith.addf %163, %168 : vector<64x32xf32>
    %170 = vector.extract_strided_slice %120 {offsets = [0, 18, 0], sizes = [2, 32, 32], strides = [1, 1, 1]} : vector<2x50x32xbf16> to vector<2x32x32xbf16>
    %171 = vector.shape_cast %170 : vector<2x32x32xbf16> to vector<64x32xbf16>
    %c8 = arith.constant 8 : index
    %c0_75 = arith.constant 0 : index
    %c0_76 = arith.constant 0 : index
    %172 = vector.load %arg12[%c8, %c0_75, %c0_76] : memref<9x32x32xbf16, #tpu.memory_space<vmem>>, vector<1x32x32xbf16>
    %173 = vector.shape_cast %172 : vector<1x32x32xbf16> to vector<32x32xbf16>
    %cst_77 = arith.constant dense<0.000000e+00> : vector<64x32xf32>
    %174 = tpu.matmul %171, %173, %cst_77 {dimension_numbers = #tpu.dot_dimension_numbers<[1], [0], [0], [1], [0, 0, 1, 1], [], []>} : vector<64x32xbf16>, vector<32x32xbf16>, vector<64x32xf32> -> vector<64x32xf32>
    %175 = arith.addf %169, %174 : vector<64x32xf32>
    %176 = vector.shape_cast %175 : vector<64x32xf32> to vector<2x32x32xf32>
    %177 = vector.shape_cast %88 : vector<2x32xf32> to vector<2x1x32xf32>
    %178 = vector.broadcast %177 : vector<2x1x32xf32> to vector<2x32x32xf32>
    %179 = arith.addf %176, %178 : vector<2x32x32xf32>
    %180 = math.tanh %179 : vector<2x32x32xf32>
    %c0_78 = arith.constant 0 : index
    %c0_79 = arith.constant 0 : index
    %c0_80 = arith.constant 0 : index
    %181 = vector.load %arg13[%c0_78, %c0_79, %c0_80] : memref<1x1x32xbf16, #tpu.memory_space<vmem>>, vector<1x1x32xbf16>
    %182 = arith.extf %181 : vector<1x1x32xbf16> to vector<1x1x32xf32>
    %183 = vector.broadcast %182 : vector<1x1x32xf32> to vector<2x32x32xf32>
    %184 = arith.mulf %180, %183 : vector<2x32x32xf32>
    %cst_81 = arith.constant dense<0.000000e+00> : vector<2x32xf32>
    %185 = vector.multi_reduction <add>, %184, %cst_81 [2] : vector<2x32x32xf32> to vector<2x32xf32>
    %186 = vector.shape_cast %185 : vector<2x32xf32> to vector<2x32x1xf32>
    %c0_82 = arith.constant 0 : index
    %c0_83 = arith.constant 0 : index
    %c0_84 = arith.constant 0 : index
    %187 = vector.load %arg15[%c0_82, %c0_83, %c0_84] : memref<2x32x1xf32, #tpu.memory_space<vmem>>, vector<2x32x1xf32>
    %cst_85 = arith.constant dense<0xFF800000> : vector<2x1xf32>
    %188 = vector.multi_reduction <maximumf>, %186, %cst_85 [1] : vector<2x32x1xf32> to vector<2x1xf32>
    %189 = vector.shape_cast %188 : vector<2x1xf32> to vector<2x1x1xf32>
    %190 = vector.broadcast %189 : vector<2x1x1xf32> to vector<2x32x1xf32>
    %191 = arith.subf %186, %190 : vector<2x32x1xf32>
    %192 = math.exp %191 : vector<2x32x1xf32>
    %193 = arith.mulf %192, %187 : vector<2x32x1xf32>
    %cst_86 = arith.constant dense<0.000000e+00> : vector<2x1xf32>
    %194 = vector.multi_reduction <add>, %193, %cst_86 [1] : vector<2x32x1xf32> to vector<2x1xf32>
    %195 = vector.shape_cast %194 : vector<2x1xf32> to vector<2x1x1xf32>
    %196 = tpu.reciprocal %195 {approx = true} : vector<2x1x1xf32> -> vector<2x1x1xf32>
    %197 = vector.broadcast %196 : vector<2x1x1xf32> to vector<2x32x1xf32>
    %198 = arith.mulf %193, %197 : vector<2x32x1xf32>
    %cst_87 = arith.constant 1.000000e-07 : f32
    %199 = vector.broadcast %cst_87 : f32 to vector<2x32x1xf32>
    %200 = arith.addf %198, %199 : vector<2x32x1xf32>
    %201 = vector.extract_strided_slice %89 {offsets = [0, 9, 0], sizes = [2, 32, 32], strides = [1, 1, 1]} : vector<2x50x32xbf16> to vector<2x32x32xbf16>
    %202 = arith.extf %201 : vector<2x32x32xbf16> to vector<2x32x32xf32>
    %203 = vector.broadcast %200 : vector<2x32x1xf32> to vector<2x32x32xf32>
    %204 = arith.mulf %203, %202 : vector<2x32x32xf32>
    %cst_88 = arith.constant dense<0.000000e+00> : vector<2x32xf32>
    %205 = vector.multi_reduction <add>, %204, %cst_88 [1] : vector<2x32x32xf32> to vector<2x32xf32>
    %c0_89 = arith.constant 0 : index
    %c0_90 = arith.constant 0 : index
    %206 = vector.load %arg16[%c0_89, %c0_90] : memref<32x128xbf16, #tpu.memory_space<vmem>>, vector<32x128xbf16>
    %cst_91 = arith.constant dense<0.000000e+00> : vector<2x128xf32>
    %207 = tpu.matmul %86, %206, %cst_91 {dimension_numbers = #tpu.dot_dimension_numbers<[1], [0], [0], [1], [0, 0, 1, 1], [], []>} : vector<2x32xbf16>, vector<32x128xbf16>, vector<2x128xf32> -> vector<2x128xf32>
    %208 = arith.truncf %205 : vector<2x32xf32> to vector<2x32xbf16>
    %c0_92 = arith.constant 0 : index
    %c0_93 = arith.constant 0 : index
    %209 = vector.load %arg17[%c0_92, %c0_93] : memref<32x128xbf16, #tpu.memory_space<vmem>>, vector<32x128xbf16>
    %cst_94 = arith.constant dense<0.000000e+00> : vector<2x128xf32>
    %210 = tpu.matmul %208, %209, %cst_94 {dimension_numbers = #tpu.dot_dimension_numbers<[1], [0], [0], [1], [0, 0, 1, 1], [], []>} : vector<2x32xbf16>, vector<32x128xbf16>, vector<2x128xf32> -> vector<2x128xf32>
    %211 = arith.addf %207, %210 : vector<2x128xf32>
    %c0_95 = arith.constant 0 : index
    %c0_96 = arith.constant 0 : index
    %212 = vector.load %arg18[%c0_95, %c0_96] : memref<1x128xf32, #tpu.memory_space<vmem>>, vector<1x128xf32>
    %213 = vector.broadcast %212 : vector<1x128xf32> to vector<2x128xf32>
    %214 = arith.addf %211, %213 : vector<2x128xf32>
    %c0_97 = arith.constant 0 : index
    %c0_98 = arith.constant 0 : index
    %215 = vector.load %arg19[%c0_97, %c0_98] : memref<2x128xf32, #tpu.memory_space<vmem>>, vector<2x128xf32>
    tpu.vector_store %arg19[%c0_97, %c0_98], %214 {strides = array<i32>} : memref<2x128xf32, #tpu.memory_space<vmem>>, vector<2x128xf32>,
    return
  }
  func.func @transform_0(%arg0: i32) -> (i32, i32) {
    %c0_i32 = arith.constant 0 : i32
    %c0_i32_0 = arith.constant 0 : i32
    return %arg0, %c0_i32 : i32, i32
  }
  func.func @transform_1(%arg0: i32) -> (i32, i32, i32) {
    %c0_i32 = arith.constant 0 : i32
    %c0_i32_0 = arith.constant 0 : i32
    %c0_i32_1 = arith.constant 0 : i32
    return %c0_i32, %arg0, %c0_i32_0 : i32, i32, i32
  }
  func.func @transform_2(%arg0: i32) -> (i32, i32) {
    %c0_i32 = arith.constant 0 : i32
    %c0_i32_0 = arith.constant 0 : i32
    %c0_i32_1 = arith.constant 0 : i32
    return %c0_i32, %c0_i32_0 : i32, i32
  }
  func.func @transform_3(%arg0: i32) -> (i32, i32) {
    %c0_i32 = arith.constant 0 : i32
    %c0_i32_0 = arith.constant 0 : i32
    %c0_i32_1 = arith.constant 0 : i32
    return %c0_i32, %c0_i32_0 : i32, i32
  }
  func.func @transform_4(%arg0: i32) -> (i32, i32) {
    %c0_i32 = arith.constant 0 : i32
    %c0_i32_0 = arith.constant 0 : i32
    %c0_i32_1 = arith.constant 0 : i32
    return %c0_i32, %c0_i32_0 : i32, i32
  }
  func.func @transform_5(%arg0: i32) -> (i32, i32) {
    %c0_i32 = arith.constant 0 : i32
    %c0_i32_0 = arith.constant 0 : i32
    %c0_i32_1 = arith.constant 0 : i32
    return %c0_i32, %c0_i32_0 : i32, i32
  }
  func.func @transform_6(%arg0: i32) -> (i32, i32) {
    %c0_i32 = arith.constant 0 : i32
    %c0_i32_0 = arith.constant 0 : i32
    %c0_i32_1 = arith.constant 0 : i32
    return %c0_i32, %c0_i32_0 : i32, i32
  }
  func.func @transform_7(%arg0: i32) -> (i32, i32) {
    %c0_i32 = arith.constant 0 : i32
    %c0_i32_0 = arith.constant 0 : i32
    %c0_i32_1 = arith.constant 0 : i32
    return %c0_i32, %c0_i32_0 : i32, i32
  }
  func.func @transform_8(%arg0: i32) -> (i32, i32) {
    %c0_i32 = arith.constant 0 : i32
    %c0_i32_0 = arith.constant 0 : i32
    %c0_i32_1 = arith.constant 0 : i32
    return %c0_i32, %c0_i32_0 : i32, i32
  }
  func.func @transform_9(%arg0: i32) -> (i32, i32) {
    %c0_i32 = arith.constant 0 : i32
    %c0_i32_0 = arith.constant 0 : i32
    %c0_i32_1 = arith.constant 0 : i32
    return %c0_i32, %c0_i32_0 : i32, i32
  }
  func.func @transform_10(%arg0: i32) -> (i32, i32) {
    %c0_i32 = arith.constant 0 : i32
    %c0_i32_0 = arith.constant 0 : i32
    %c0_i32_1 = arith.constant 0 : i32
    return %c0_i32, %c0_i32_0 : i32, i32
  }
  func.func @transform_11(%arg0: i32) -> (i32, i32, i32) {
    %c0_i32 = arith.constant 0 : i32
    %c0_i32_0 = arith.constant 0 : i32
    %c0_i32_1 = arith.constant 0 : i32
    %c0_i32_2 = arith.constant 0 : i32
    return %c0_i32, %c0_i32_0, %c0_i32_1 : i32, i32, i32
  }
  func.func @transform_12(%arg0: i32) -> (i32, i32, i32) {
    %c0_i32 = arith.constant 0 : i32
    %c0_i32_0 = arith.constant 0 : i32
    %c0_i32_1 = arith.constant 0 : i32
    %c0_i32_2 = arith.constant 0 : i32
    return %c0_i32, %c0_i32_0, %c0_i32_1 : i32, i32, i32
  }
  func.func @transform_13(%arg0: i32) -> (i32, i32, i32) {
    %c0_i32 = arith.constant 0 : i32
    %c0_i32_0 = arith.constant 0 : i32
    %c0_i32_1 = arith.constant 0 : i32
    return %arg0, %c0_i32, %c0_i32_0 : i32, i32, i32
  }
  func.func @transform_14(%arg0: i32) -> (i32, i32, i32) {
    %c0_i32 = arith.constant 0 : i32
    %c0_i32_0 = arith.constant 0 : i32
    %c0_i32_1 = arith.constant 0 : i32
    return %arg0, %c0_i32, %c0_i32_0 : i32, i32, i32
  }
  func.func @transform_15(%arg0: i32) -> (i32, i32) {
    %c0_i32 = arith.constant 0 : i32
    %c0_i32_0 = arith.constant 0 : i32
    %c0_i32_1 = arith.constant 0 : i32
    return %c0_i32, %c0_i32_0 : i32, i32
  }
  func.func @transform_16(%arg0: i32) -> (i32, i32) {
    %c0_i32 = arith.constant 0 : i32
    %c0_i32_0 = arith.constant 0 : i32
    %c0_i32_1 = arith.constant 0 : i32
    return %c0_i32, %c0_i32_0 : i32, i32
  }
  func.func @transform_17(%arg0: i32) -> (i32, i32) {
    %c0_i32 = arith.constant 0 : i32
    %c0_i32_0 = arith.constant 0 : i32
    %c0_i32_1 = arith.constant 0 : i32
    return %c0_i32, %c0_i32_0 : i32, i32
  }
  func.func @transform_18(%arg0: i32) -> (i32, i32) {
    %c0_i32 = arith.constant 0 : i32
    %c0_i32_0 = arith.constant 0 : i32
    return %arg0, %c0_i32 : i32, i32
  }
  func.func @transform_19(%arg0: i32) -> (i32, i32, i32) {
    %c0_i32 = arith.constant 0 : i32
    %c0_i32_0 = arith.constant 0 : i32
    %c0_i32_1 = arith.constant 0 : i32
    return %c0_i32, %arg0, %c0_i32_0 : i32, i32, i32
  }
}

</mosaic_0001>

<llo_original>
// kernel: decoder_step.1
$region0: #{decoder_step.1}
  #allocation0 [shape = 'u32[]', space=smem, size = 0x4, offset = 0x4, fixed_abs, tag = 'smem constant byte address 0x4 - core index']
  #allocation1 [shape = 'u32[144,128]{1,0:T(1,128)}', space=vmem, size = 0x12000, scoped, tag = 'internal scratch']
  %s0 = inlined_call_operand.vmem [shape: bf16[2,32], index: 0, kind: input, shape index: {}]
  %s1 = inlined_call_operand.vmem [shape: f32[2,2,32], index: 1, kind: input, shape index: {}, may-alias: {1,19}]
  %s2 = inlined_call_operand.vmem [shape: bf16[32,96], index: 2, kind: input, shape index: {}]
  %s3 = inlined_call_operand.vmem [shape: bf16[32,96], index: 3, kind: input, shape index: {}]
  %s4 = inlined_call_operand.vmem [shape: f32[1,96], index: 4, kind: input, shape index: {}]
  %s5 = inlined_call_operand.vmem [shape: f32[1,96], index: 5, kind: input, shape index: {}]
  %s6 = inlined_call_operand.vmem [shape: bf16[32,96], index: 6, kind: input, shape index: {}]
  %s7 = inlined_call_operand.vmem [shape: bf16[32,96], index: 7, kind: input, shape index: {}]
  %s8 = inlined_call_operand.vmem [shape: f32[1,96], index: 8, kind: input, shape index: {}]
  %s9 = inlined_call_operand.vmem [shape: f32[1,96], index: 9, kind: input, shape index: {}]
  %s10 = inlined_call_operand.vmem [shape: bf16[32,32], index: 10, kind: input, shape index: {}]
  %s11 = inlined_call_operand.vmem [shape: bf16[9,32,32], index: 11, kind: input, shape index: {}]
  %s12 = inlined_call_operand.hbm [shape: bf16[1,1,32], index: 12, kind: input, shape index: {}]
  %s13 = inlined_call_operand.vmem [shape: bf16[2,50,32], index: 13, kind: input, shape index: {}]
  %s14 = inlined_call_operand.vmem [shape: f32[2,32,1], index: 14, kind: input, shape index: {}]
  %s15 = inlined_call_operand.hbm [shape: bf16[32,128], index: 15, kind: input, shape index: {}]
  %s16 = inlined_call_operand.hbm [shape: bf16[32,128], index: 16, kind: input, shape index: {}]
  %s17 = inlined_call_operand.vmem [shape: f32[1,128], index: 17, kind: input, shape index: {}]
  %s18 = inlined_call_operand.hbm [shape: f32[2,128], index: 18, kind: output, shape index: {0}]
  %s19 = inlined_call_operand.vmem [shape: f32[2,2,32], index: 19, kind: output, shape index: {1}, may-alias: {1,19}]
  %20 = xla_tuple %s18, %s19
  %s21 = sld [smem:[#allocation0]]
  $region102: #{decoder_step.1} parent=0
    _
  %s23 = ssub.s32 1, %s21
  %s24 = scalar_select 0, %s23, %s21
  $region1: #{decoder_step.1} parent=0
    #allocation2 [shape = 'u8[512]{0}', space=vmem, size = 0x400, scoped, tag = 'input window, operand 12, single buffered']
    #allocation3 [shape = 's32[1]{0}', space=sflag, size = 0x4, scoped, tag = 'scoped memory for decoder_step.1']
    #allocation4 [shape = 's32[1]{0}', space=sflag, size = 0x4, scoped, tag = 'scoped memory for decoder_step.1']
    #allocation5 [shape = 'u8[8192]{0}', space=vmem, size = 0x2000, scoped, tag = 'input window, operand 15, single buffered']
    #allocation6 [shape = 's32[1]{0}', space=sflag, size = 0x4, scoped, tag = 'scoped memory for decoder_step.1']
    #allocation7 [shape = 'u8[8192]{0}', space=vmem, size = 0x2000, scoped, tag = 'input window, operand 16, single buffered']
    #allocation8 [shape = 'u8[1024]{0}', space=vmem, size = 0x400, scoped, tag = 'output window, operand 0, single buffered']
    %25 = vsyncpa [#allocation3], 0
    %26 = vsyncpa [#allocation6], 0
    %27 = vsyncpa [#allocation4], 0
    // Predicated region
    $region2: #{decoder_step.1} parent=1 // pred_check
      _
    $region3: #{decoder_step.1} parent=1 // pred_check_branch
      %29 = sbr.rel (0) target = $region5
    $region4: #{decoder_step.1} parent=1 // pred_region
      _
    $region5: #{decoder_step.1} parent=1 // pred_fallthru
      _
    // Predicated region
    $region6: #{decoder_step.1} parent=1 // pred_check
      _
    $region7: #{decoder_step.1} parent=1 // pred_check_branch
      %31 = sbr.rel (0) target = $region9
    $region8: #{decoder_step.1} parent=1 // pred_region
      _
    $region9: #{decoder_step.1} parent=1 // pred_fallthru
      _
    // Predicated region
    $region10: #{decoder_step.1} parent=1 // pred_check
      _
    $region11: #{decoder_step.1} parent=1 // pred_check_branch
      %33 = sbr.rel (0) target = $region13
    $region12: #{decoder_step.1} parent=1 // pred_region
      _
    $region13: #{decoder_step.1} parent=1 // pred_fallthru
      _
    // Predicated region
    $region14: #{decoder_step.1} parent=1 // pred_check
      _
    $region15: #{decoder_step.1} parent=1 // pred_check_branch
      %35 = sbr.rel (0) target = $region17
    $region16: #{decoder_step.1} parent=1 // pred_region
      _
    $region17: #{decoder_step.1} parent=1 // pred_fallthru
      _
    // Predicated region
    $region18: #{decoder_step.1} parent=1 // pred_check
      _
    $region19: #{decoder_step.1} parent=1 // pred_check_branch
      %37 = sbr.rel (0) target = $region21
    $region20: #{decoder_step.1} parent=1 // pred_region
      _
    $region21: #{decoder_step.1} parent=1 // pred_fallthru
      _
    // Predicated region
    $region22: #{decoder_step.1} parent=1 // pred_check
      _
    $region23: #{decoder_step.1} parent=1 // pred_check_branch
      %39 = sbr.rel (0) target = $region25
    $region24: #{decoder_step.1} parent=1 // pred_region
      _
    $region25: #{decoder_step.1} parent=1 // pred_fallthru
      _
    // Predicated region
    $region26: #{decoder_step.1} parent=1 // pred_check
      _
    $region27: #{decoder_step.1} parent=1 // pred_check_branch
      %41 = sbr.rel (0) target = $region29
    $region28: #{decoder_step.1} parent=1 // pred_region
      _
    $region29: #{decoder_step.1} parent=1 // pred_fallthru
      _
    // Predicated region
    $region30: #{decoder_step.1} parent=1 // pred_check
      _
    $region31: #{decoder_step.1} parent=1 // pred_check_branch
      %43 = sbr.rel (0) target = $region33
    $region32: #{decoder_step.1} parent=1 // pred_region
      _
    $region33: #{decoder_step.1} parent=1 // pred_fallthru
      _
    // Predicated region
    $region34: #{decoder_step.1} parent=1 // pred_check
      _
    $region35: #{decoder_step.1} parent=1 // pred_check_branch
      %45 = sbr.rel (0) target = $region37
    $region36: #{decoder_step.1} parent=1 // pred_region
      _
    $region37: #{decoder_step.1} parent=1 // pred_fallthru
      _
    // Predicated region
    $region38: #{decoder_step.1} parent=1 // pred_check
      _
    $region39: #{decoder_step.1} parent=1 // pred_check_branch
      %47 = sbr.rel (0) target = $region41
    $region40: #{decoder_step.1} parent=1 // pred_region
      _
    $region41: #{decoder_step.1} parent=1 // pred_fallthru
      _
    // Predicated region
    $region42: #{decoder_step.1} parent=1 // pred_check
      _
    $region43: #{decoder_step.1} parent=1 // pred_check_branch
      %49 = sbr.rel (0) target = $region45
    $region44: #{decoder_step.1} parent=1 // pred_region
      _
    $region45: #{decoder_step.1} parent=1 // pred_fallthru
      _
    // Predicated region
    $region46: #{decoder_step.1} parent=1 // pred_check
      _
    $region47: #{decoder_step.1} parent=1 // pred_check_branch
      %51 = sbr.rel (0) target = $region49
    $region48: #{decoder_step.1} parent=1 // pred_region
      _
    $region49: #{decoder_step.1} parent=1 // pred_fallthru
      _
    // Predicated region
    $region50: #{decoder_step.1} parent=1 // pred_check
      _
    $region51: #{decoder_step.1} parent=1 // pred_check_branch
      %53 = sbr.rel (0) target = $region53
    $region52: #{decoder_step.1} parent=1 // pred_region
      %s55 = ssub.s32 16, 16
      %56 = vsyncadd [#allocation3], %s55
      %s58 = sshll.u32 [#allocation2], 4
      %s59 = int_to_ptr.vmem [resolvable:$true] %s58
      %61 = dma.hbm_to_vmem [thread:$0]  %s12, 16, %s59, [#allocation3]
    $region53: #{decoder_step.1} parent=1 // pred_fallthru
      _
    // Predicated region
    $region54: #{decoder_step.1} parent=1 // pred_check
      _
    $region55: #{decoder_step.1} parent=1 // pred_check_branch
      %63 = sbr.rel (0) target = $region57
    $region56: #{decoder_step.1} parent=1 // pred_region
      _
    $region57: #{decoder_step.1} parent=1 // pred_fallthru
      _
    // Predicated region
    $region58: #{decoder_step.1} parent=1 // pred_check
      _
    $region59: #{decoder_step.1} parent=1 // pred_check_branch
      %65 = sbr.rel (0) target = $region61
    $region60: #{decoder_step.1} parent=1 // pred_region
      _
    $region61: #{decoder_step.1} parent=1 // pred_fallthru
      _
    // Predicated region
    $region62: #{decoder_step.1} parent=1 // pred_check
      _
    $region63: #{decoder_step.1} parent=1 // pred_check_branch
      %67 = sbr.rel (0) target = $region65
    $region64: #{decoder_step.1} parent=1 // pred_region
      %s69 = ssub.s32 256, 256
      %70 = vsyncadd [#allocation6], %s69
      %s71 = sshll.u32 [#allocation5], 4
      %s72 = int_to_ptr.vmem [resolvable:$true] %s71
      %77 = dma.hbm_to_vmem [thread:$0]  %s15, 256, %s72, [#allocation6], 64, 64, 4
    $region65: #{decoder_step.1} parent=1 // pred_fallthru
      _
    // Predicated region
    $region66: #{decoder_step.1} parent=1 // pred_check
      _
    $region67: #{decoder_step.1} parent=1 // pred_check_branch
      %79 = sbr.rel (0) target = $region69
    $region68: #{decoder_step.1} parent=1 // pred_region
      %s81 = ssub.s32 256, 256
      %82 = vsyncadd [#allocation6], %s81
      %s83 = sshll.u32 [#allocation7], 4
      %s84 = int_to_ptr.vmem [resolvable:$true] %s83
      %89 = dma.hbm_to_vmem [thread:$0]  %s16, 256, %s84, [#allocation6], 64, 64, 4
    $region69: #{decoder_step.1} parent=1 // pred_fallthru
      _
    // Predicated region
    $region70: #{decoder_step.1} parent=1 // pred_check
      _
    $region71: #{decoder_step.1} parent=1 // pred_check_branch
      %91 = sbr.rel (0) target = $region73
    $region72: #{decoder_step.1} parent=1 // pred_region
      _
    $region73: #{decoder_step.1} parent=1 // pred_fallthru
      _
    // Predicated region
    $region74: #{decoder_step.1} parent=1 // pred_check
      _
    $region75: #{decoder_step.1} parent=1 // pred_check_branch
      %93 = sbr.rel (0) target = $region77
    $region76: #{decoder_step.1} parent=1 // pred_region
      %94 = dma.done [#allocation3], 16
    $region77: #{decoder_step.1} parent=1 // pred_fallthru
      _
    // Predicated region
    $region78: #{decoder_step.1} parent=1 // pred_check
      _
    $region79: #{decoder_step.1} parent=1 // pred_check_branch
      %96 = sbr.rel (0) target = $region81
    $region80: #{decoder_step.1} parent=1 // pred_region
      %97 = dma.done [#allocation6], 256
    $region81: #{decoder_step.1} parent=1 // pred_fallthru
      _
    // Predicated region
    $region82: #{decoder_step.1} parent=1 // pred_check
      _
    $region83: #{decoder_step.1} parent=1 // pred_check_branch
      %99 = sbr.rel (0) target = $region85
    $region84: #{decoder_step.1} parent=1 // pred_region
      %100 = dma.done [#allocation6], 256
    $region85: #{decoder_step.1} parent=1 // pred_fallthru
      _
    %v102 = vld [vmem:[%s0] sm:$0x1]
    %v103 = vld [vmem:[%s1] sm:$0x3]
    %v104 = vld [vmem:[%s2] sm:$0xf]
    %v105 = vld [vmem:[%s2 + $0x4] sm:$0xf]
    %v106 = vld [vmem:[%s2 + $0x8] sm:$0xf]
    %v107 = vld [vmem:[%s2 + $0xc] sm:$0xf]
    %v108 = vld [vmem:[%s4] sm:$0x1]
    %v110 = vlaneseq
    %v111 = vshrl.u32 %v110, 7
    %v112 = vsub.s32 0, %v111
    %v113 = vrot.slane %v108, %v112
    %v119 = vunpack.c.l.b16 %v104
    %v120 = vunpack.c.l.b16 %v105
    %v121 = vunpack.c.l.b16 %v106
    %v122 = vunpack.c.l.b16 %v107
    %v123 = vpack.c.b16 %v120, %v119
    %v124 = vpack.c.b16 %v122, %v121
    %vm127 = vcmask 261120
    %v129 = vsel %vm127, %v102, 0
    %131 = vmatprep.subr.bf16.mxu0 0
    %132 = vmatpush1.bf16.msra.mxu0 %v123
    %133 = vmatprep.subr.bf16.mxu0 0
    %134 = vmatpush1.bf16.msra.mxu0 %v124
    %135 = vmatprep.subr.bf16.mxu0 0
    %136 = vmatpush1.bf16.msra.mxu0 0
    %137 = vmatprep.subr.bf16.mxu0 0
    %138 = vmatpush1.bf16.msra.mxu0 0
    %139 = vmatprep.subr.bf16.mxu0 0
    %140 = vmatpush1.bf16.msra.mxu0 0
    %141 = vmatprep.subr.bf16.mxu0 0
    %142 = vmatpush1.bf16.msra.mxu0 0
    %143 = vmatprep.subr.bf16.mxu0 0
    %144 = vmatpush1.bf16.msra.mxu0 0
    %145 = vmatprep.subr.bf16.mxu0 0
    %146 = vmatpush1.bf16.msra.mxu0 0
    %147 = vmatprep.subr.bf16.mxu0 0
    %148 = vmatpush1.bf16.msra.mxu0 0
    %149 = vmatprep.subr.bf16.mxu0 0
    %150 = vmatpush1.bf16.msra.mxu0 0
    %151 = vmatprep.subr.bf16.mxu0 0
    %152 = vmatpush1.bf16.msra.mxu0 0
    %153 = vmatprep.subr.bf16.mxu0 0
    %154 = vmatpush1.bf16.msra.mxu0 0
    %155 = vmatprep.subr.bf16.mxu0 0
    %156 = vmatpush1.bf16.msra.mxu0 0
    %157 = vmatprep.subr.bf16.mxu0 0
    %158 = vmatpush1.bf16.msra.mxu0 0
    %159 = vmatprep.subr.bf16.mxu0 0
    %160 = vmatpush1.bf16.msra.mxu0 0
    %161 = vmatprep.subr.bf16.mxu0 0
    %162 = vmatpush1.bf16.msra.mxu0 0
    %163 = vmatprep.mubr.bf16.mxu0 0
    %164 = vmatmul.mubr.bf16.gmra.mrb[0].mxu0 %v129
    %v165 = vpop.f32.mrb[0].mxu0
    %v166 = vadd.f32 %v113, %v165
    %v167 = vpop.f32.mrb[0].mxu0
    %v168 = vpop.f32.mrb[0].mxu0
    %v169 = vpop.f32.mrb[0].mxu0
    %170 = vdwg.mxu0
    %v171 = vpack.c.bf16 %v103, %v103
    %v172 = vld [vmem:[%s3] sm:$0xf]
    %v173 = vld [vmem:[%s3 + $0x4] sm:$0xf]
    %v174 = vld [vmem:[%s3 + $0x8] sm:$0xf]
    %v175 = vld [vmem:[%s3 + $0xc] sm:$0xf]
    %v176 = vld [vmem:[%s5] sm:$0x1]
    %v178 = vlaneseq
    %v179 = vshrl.u32 %v178, 7
    %v180 = vsub.s32 0, %v179
    %v181 = vrot.slane %v176, %v180
    %v187 = vunpack.c.l.b16 %v172
    %v188 = vunpack.c.l.b16 %v173
    %v189 = vunpack.c.l.b16 %v174
    %v190 = vunpack.c.l.b16 %v175
    %v191 = vpack.c.b16 %v188, %v187
    %v192 = vpack.c.b16 %v190, %v189
    %v196 = vsel %vm127, %v171, 0
    %198 = vmatprep.subr.bf16.mxu0 0
    %199 = vmatpush1.bf16.msra.mxu0 %v191
    %200 = vmatprep.subr.bf16.mxu0 0
    %201 = vmatpush1.bf16.msra.mxu0 %v192
    %202 = vmatprep.subr.bf16.mxu0 0
    %203 = vmatpush1.bf16.msra.mxu0 0
    %204 = vmatprep.subr.bf16.mxu0 0
    %205 = vmatpush1.bf16.msra.mxu0 0
    %206 = vmatprep.subr.bf16.mxu0 0
    %207 = vmatpush1.bf16.msra.mxu0 0
    %208 = vmatprep.subr.bf16.mxu0 0
    %209 = vmatpush1.bf16.msra.mxu0 0
    %210 = vmatprep.subr.bf16.mxu0 0
    %211 = vmatpush1.bf16.msra.mxu0 0
    %212 = vmatprep.subr.bf16.mxu0 0
    %213 = vmatpush1.bf16.msra.mxu0 0
    %214 = vmatprep.subr.bf16.mxu0 0
    %215 = vmatpush1.bf16.msra.mxu0 0
    %216 = vmatprep.subr.bf16.mxu0 0
    %217 = vmatpush1.bf16.msra.mxu0 0
    %218 = vmatprep.subr.bf16.mxu0 0
    %219 = vmatpush1.bf16.msra.mxu0 0
    %220 = vmatprep.subr.bf16.mxu0 0
    %221 = vmatpush1.bf16.msra.mxu0 0
    %222 = vmatprep.subr.bf16.mxu0 0
    %223 = vmatpush1.bf16.msra.mxu0 0
    %224 = vmatprep.subr.bf16.mxu0 0
    %225 = vmatpush1.bf16.msra.mxu0 0
    %226 = vmatprep.subr.bf16.mxu0 0
    %227 = vmatpush1.bf16.msra.mxu0 0
    %228 = vmatprep.subr.bf16.mxu0 0
    %229 = vmatpush1.bf16.msra.mxu0 0
    %230 = vmatprep.mubr.bf16.mxu0 0
    %231 = vmatmul.mubr.bf16.gmra.mrb[0].mxu0 %v196
    %v232 = vpop.f32.mrb[0].mxu0
    %v233 = vadd.f32 %v181, %v232
    %v234 = vpop.f32.mrb[0].mxu0
    %v235 = vpop.f32.mrb[0].mxu0
    %v236 = vpop.f32.mrb[0].mxu0
    %237 = vdwg.mxu0
    %v238 = vadd.f32 %v166, %v233
    %v239 = vxor.u32 %v238, 2147483648
    %v240 = vmul.f32 %v239, 1.442695
    %v241 = vpow.pop %v240
    %v242 = vadd.f32 %v241, 1.0
    %v243 = vrcp.pop %v242
    %v244 = vmul.f32 1.0, %v243
    %246 = vrot.lane.b32.xlu0 %v233, 64
    %v247 = vpop.permute.xlu0 %246
    %v249 = vmul.f32 %v244, %v247
    %251 = vrot.lane.b32.xlu0 %v249, 64
    %v252 = vpop.permute.xlu0 %251
    %v254 = vadd.f32 %v166, %v252
    %v255 = vtanh.pop %v254
    %v256 = vsub.f32 1.0, %v244
    %258 = vrot.lane.b32.xlu0 %v255, 96
    %v259 = vpop.permute.xlu0 %258
    %v261 = vmul.f32 %v256, %v259
    %263 = vrot.lane.b32.xlu0 %v103, 32
    %v264 = vpop.permute.xlu0 %263
    %v266 = vmul.f32 %v244, %v264
    %v267 = vadd.f32 %v261, %v266
    %v268 = vpack.c.bf16 %v267, %v267
    %s269 = scalar_lea.vmem %s1, 2
    %v270 = vld [vmem:[%s269] sm:$0x3]
    %v271 = vld [vmem:[%s6] sm:$0xf]
    %v272 = vld [vmem:[%s6 + $0x4] sm:$0xf]
    %v273 = vld [vmem:[%s6 + $0x8] sm:$0xf]
    %v274 = vld [vmem:[%s6 + $0xc] sm:$0xf]
    %v275 = vld [vmem:[%s8] sm:$0x1]
    %v277 = vlaneseq
    %v278 = vshrl.u32 %v277, 7
    %v279 = vsub.s32 0, %v278
    %v280 = vrot.slane %v275, %v279
    %283 = vrot.lane.b32.xlu0 %v268, 96
    %v284 = vpop.permute.xlu0 %283
    %v289 = vunpack.c.l.b16 %v271
    %v290 = vunpack.c.l.b16 %v272
    %v291 = vunpack.c.l.b16 %v273
    %v292 = vunpack.c.l.b16 %v274
    %v293 = vpack.c.b16 %v290, %v289
    %v294 = vpack.c.b16 %v292, %v291
    %v298 = vsel %vm127, %v284, 0
    %300 = vmatprep.subr.bf16.mxu0 0
    %301 = vmatpush1.bf16.msra.mxu0 %v293
    %302 = vmatprep.subr.bf16.mxu0 0
    %303 = vmatpush1.bf16.msra.mxu0 %v294
    %304 = vmatprep.subr.bf16.mxu0 0
    %305 = vmatpush1.bf16.msra.mxu0 0
    %306 = vmatprep.subr.bf16.mxu0 0
    %307 = vmatpush1.bf16.msra.mxu0 0
    %308 = vmatprep.subr.bf16.mxu0 0
    %309 = vmatpush1.bf16.msra.mxu0 0
    %310 = vmatprep.subr.bf16.mxu0 0
    %311 = vmatpush1.bf16.msra.mxu0 0
    %312 = vmatprep.subr.bf16.mxu0 0
    %313 = vmatpush1.bf16.msra.mxu0 0
    %314 = vmatprep.subr.bf16.mxu0 0
    %315 = vmatpush1.bf16.msra.mxu0 0
    %316 = vmatprep.subr.bf16.mxu0 0
    %317 = vmatpush1.bf16.msra.mxu0 0
    %318 = vmatprep.subr.bf16.mxu0 0
    %319 = vmatpush1.bf16.msra.mxu0 0
    %320 = vmatprep.subr.bf16.mxu0 0
    %321 = vmatpush1.bf16.msra.mxu0 0
    %322 = vmatprep.subr.bf16.mxu0 0
    %323 = vmatpush1.bf16.msra.mxu0 0
    %324 = vmatprep.subr.bf16.mxu0 0
    %325 = vmatpush1.bf16.msra.mxu0 0
    %326 = vmatprep.subr.bf16.mxu0 0
    %327 = vmatpush1.bf16.msra.mxu0 0
    %328 = vmatprep.subr.bf16.mxu0 0
    %329 = vmatpush1.bf16.msra.mxu0 0
    %330 = vmatprep.subr.bf16.mxu0 0
    %331 = vmatpush1.bf16.msra.mxu0 0
    %332 = vmatprep.mubr.bf16.mxu0 0
    %333 = vmatmul.mubr.bf16.gmra.mrb[0].mxu0 %v298
    %v334 = vpop.f32.mrb[0].mxu0
    %v335 = vadd.f32 %v280, %v334
    %v336 = vpop.f32.mrb[0].mxu0
    %v337 = vpop.f32.mrb[0].mxu0
    %v338 = vpop.f32.mrb[0].mxu0
    %339 = vdwg.mxu0
    %v340 = vpack.c.bf16 %v270, %v270
    %v341 = vld [vmem:[%s7] sm:$0xf]
    %v342 = vld [vmem:[%s7 + $0x4] sm:$0xf]
    %v343 = vld [vmem:[%s7 + $0x8] sm:$0xf]
    %v344 = vld [vmem:[%s7 + $0xc] sm:$0xf]
    %v345 = vld [vmem:[%s9] sm:$0x1]
    %v347 = vlaneseq
    %v348 = vshrl.u32 %v347, 7
    %v349 = vsub.s32 0, %v348
    %v350 = vrot.slane %v345, %v349
    %v356 = vunpack.c.l.b16 %v341
    %v357 = vunpack.c.l.b16 %v342
    %v358 = vunpack.c.l.b16 %v343
    %v359 = vunpack.c.l.b16 %v344
    %v360 = vpack.c.b16 %v357, %v356
    %v361 = vpack.c.b16 %v359, %v358
    %v365 = vsel %vm127, %v340, 0
    %367 = vmatprep.subr.bf16.mxu0 0
    %368 = vmatpush1.bf16.msra.mxu0 %v360
    %369 = vmatprep.subr.bf16.mxu0 0
    %370 = vmatpush1.bf16.msra.mxu0 %v361
    %371 = vmatprep.subr.bf16.mxu0 0
    %372 = vmatpush1.bf16.msra.mxu0 0
    %373 = vmatprep.subr.bf16.mxu0 0
    %374 = vmatpush1.bf16.msra.mxu0 0
    %375 = vmatprep.subr.bf16.mxu0 0
    %376 = vmatpush1.bf16.msra.mxu0 0
    %377 = vmatprep.subr.bf16.mxu0 0
    %378 = vmatpush1.bf16.msra.mxu0 0
    %379 = vmatprep.subr.bf16.mxu0 0
    %380 = vmatpush1.bf16.msra.mxu0 0
    %381 = vmatprep.subr.bf16.mxu0 0
    %382 = vmatpush1.bf16.msra.mxu0 0
    %383 = vmatprep.subr.bf16.mxu0 0
    %384 = vmatpush1.bf16.msra.mxu0 0
    %385 = vmatprep.subr.bf16.mxu0 0
    %386 = vmatpush1.bf16.msra.mxu0 0
    %387 = vmatprep.subr.bf16.mxu0 0
    %388 = vmatpush1.bf16.msra.mxu0 0
    %389 = vmatprep.subr.bf16.mxu0 0
    %390 = vmatpush1.bf16.msra.mxu0 0
    %391 = vmatprep.subr.bf16.mxu0 0
    %392 = vmatpush1.bf16.msra.mxu0 0
    %393 = vmatprep.subr.bf16.mxu0 0
    %394 = vmatpush1.bf16.msra.mxu0 0
    %395 = vmatprep.subr.bf16.mxu0 0
    %396 = vmatpush1.bf16.msra.mxu0 0
    %397 = vmatprep.subr.bf16.mxu0 0
    %398 = vmatpush1.bf16.msra.mxu0 0
    %399 = vmatprep.mubr.bf16.mxu0 0
    %400 = vmatmul.mubr.bf16.gmra.mrb[0].mxu0 %v365
    %v401 = vpop.f32.mrb[0].mxu0
    %v402 = vadd.f32 %v350, %v401
    %v403 = vpop.f32.mrb[0].mxu0
    %v404 = vpop.f32.mrb[0].mxu0
    %v405 = vpop.f32.mrb[0].mxu0
    %406 = vdwg.mxu0
    %v407 = vadd.f32 %v335, %v402
    %v408 = vxor.u32 %v407, 2147483648
    %v409 = vmul.f32 %v408, 1.442695
    %v410 = vpow.pop %v409
    %v411 = vadd.f32 %v410, 1.0
    %v412 = vrcp.pop %v411
    %v413 = vmul.f32 1.0, %v412
    %415 = vrot.lane.b32.xlu0 %v402, 64
    %v416 = vpop.permute.xlu0 %415
    %v418 = vmul.f32 %v413, %v416
    %420 = vrot.lane.b32.xlu0 %v418, 64
    %v421 = vpop.permute.xlu0 %420
    %v423 = vadd.f32 %v335, %v421
    %v424 = vtanh.pop %v423
    %v425 = vsub.f32 1.0, %v413
    %427 = vrot.lane.b32.xlu0 %v424, 96
    %v428 = vpop.permute.xlu0 %427
    %v430 = vmul.f32 %v425, %v428
    %432 = vrot.lane.b32.xlu0 %v270, 32
    %v433 = vpop.permute.xlu0 %432
    %v435 = vmul.f32 %v413, %v433
    %v436 = vadd.f32 %v430, %v435
    %438 = vrot.lane.b32.xlu0 %v267, 96
    %v439 = vpop.permute.xlu0 %438
    %vm441 = vcmask 254976
    %442 = vst.msk [vmem:[%s19] sm:$0x3] %vm441, %v439
    %444 = vrot.lane.b32.xlu0 %v436, 96
    %v445 = vpop.permute.xlu0 %444
    %s447 = scalar_lea.vmem %s19, 2
    %448 = vst.msk [vmem:[%s447] sm:$0x3] %vm441, %v445
    %v449 = vpack.c.bf16 %v436, %v436
    %v450 = vld [vmem:[%s10] sm:$0xf]
    %v451 = vld [vmem:[%s10 + $0x4] sm:$0xf]
    %v452 = vld [vmem:[%s10 + $0x8] sm:$0xf]
    %v453 = vld [vmem:[%s10 + $0xc] sm:$0xf]
    %455 = vrot.lane.b32.xlu0 %v449, 96
    %v456 = vpop.permute.xlu0 %455
    %v461 = vunpack.c.l.b16 %v450
    %v462 = vunpack.c.l.b16 %v451
    %v463 = vunpack.c.l.b16 %v452
    %v464 = vunpack.c.l.b16 %v453
    %v465 = vpack.c.b16 %v462, %v461
    %v466 = vpack.c.b16 %v464, %v463
    %v470 = vsel %vm127, %v456, 0
    %472 = vmatprep.subr.bf16.mxu0 0
    %473 = vmatpush1.bf16.msra.mxu0 %v465
    %474 = vmatprep.subr.bf16.mxu0 0
    %475 = vmatpush1.bf16.msra.mxu0 %v466
    %476 = vmatprep.subr.bf16.mxu0 0
    %477 = vmatpush1.bf16.msra.mxu0 0
    %478 = vmatprep.subr.bf16.mxu0 0
    %479 = vmatpush1.bf16.msra.mxu0 0
    %480 = vmatprep.subr.bf16.mxu0 0
    %481 = vmatpush1.bf16.msra.mxu0 0
    %482 = vmatprep.subr.bf16.mxu0 0
    %483 = vmatpush1.bf16.msra.mxu0 0
    %484 = vmatprep.subr.bf16.mxu0 0
    %485 = vmatpush1.bf16.msra.mxu0 0
    %486 = vmatprep.subr.bf16.mxu0 0
    %487 = vmatpush1.bf16.msra.mxu0 0
    %488 = vmatprep.subr.bf16.mxu0 0
    %489 = vmatpush1.bf16.msra.mxu0 0
    %490 = vmatprep.subr.bf16.mxu0 0
    %491 = vmatpush1.bf16.msra.mxu0 0
    %492 = vmatprep.subr.bf16.mxu0 0
    %493 = vmatpush1.bf16.msra.mxu0 0
    %494 = vmatprep.subr.bf16.mxu0 0
    %495 = vmatpush1.bf16.msra.mxu0 0
    %496 = vmatprep.subr.bf16.mxu0 0
    %497 = vmatpush1.bf16.msra.mxu0 0
    %498 = vmatprep.subr.bf16.mxu0 0
    %499 = vmatpush1.bf16.msra.mxu0 0
    %500 = vmatprep.subr.bf16.mxu0 0
    %501 = vmatpush1.bf16.msra.mxu0 0
    %502 = vmatprep.subr.bf16.mxu0 0
    %503 = vmatpush1.bf16.msra.mxu0 0
    %504 = vmatprep.mubr.bf16.mxu0 0
    %505 = vmatmul.mubr.bf16.gmra.mrb[0].mxu0 %v470
    %v506 = vpop.f32.mrb[0].mxu0
    %v507 = vadd.f32 0.0, %v506
    %v508 = vpop.f32.mrb[0].mxu0
    %v509 = vpop.f32.mrb[0].mxu0
    %v510 = vpop.f32.mrb[0].mxu0
    %511 = vdwg.mxu0
    %v512 = vld [vmem:[%s13] sm:$0xf]
    %v513 = vld [vmem:[%s13 + $0x4] sm:$0xf]
    %v514 = vld [vmem:[%s13 + $0x8] sm:$0xf]
    %v515 = vld [vmem:[%s13 + $0xc] sm:$0xf]
    %v516 = vld [vmem:[%s13 + $0x10] sm:$0xf]
    %v517 = vld [vmem:[%s13 + $0x14] sm:$0xf]
    %v518 = vld [vmem:[%s13 + $0x18] sm:$0x1]
    %v519 = vld [vmem:[%s13 + $0x1c] sm:$0xf]
    %v520 = vld [vmem:[%s13 + $0x20] sm:$0xf]
    %v521 = vld [vmem:[%s13 + $0x24] sm:$0xf]
    %v522 = vld [vmem:[%s13 + $0x28] sm:$0xf]
    %v523 = vld [vmem:[%s13 + $0x2c] sm:$0xf]
    %v524 = vld [vmem:[%s13 + $0x30] sm:$0xf]
    %v525 = vld [vmem:[%s13 + $0x34] sm:$0x1]
    %v526 = vlaneseq
    %v527 = vshrl.u32 %v526, 7
    %v528 = vadd.s32 %v527, 8
    %v529 = vadd.s32 %v527, 16
    %v530 = vadd.s32 %v527, 24
    %v531 = vadd.s32 %v527, 32
    %v532 = vadd.s32 %v527, 40
    %v533 = vadd.s32 %v527, 48
    %vm534 = vcmp.lt.s32.totalorder %v527, 0
    %v535 = vsub.s32 0, %v527
    %v536 = vsel %vm534, %v535, %v527
    %v537 = vshrl.u32 %v536, 3
    %v538 = vand.u32 %v536, 7
    %v539 = vsub.s32 0, %v538
    %v540 = vsel %vm534, %v539, %v538
    %vm541 = vcmp.lt.s32.totalorder %v528, 0
    %v542 = vsub.s32 0, %v528
    %v543 = vsel %vm541, %v542, %v528
    %v544 = vshrl.u32 %v543, 3
    %v545 = vand.u32 %v543, 7
    %v546 = vsub.s32 0, %v545
    %v547 = vsel %vm541, %v546, %v545
    %vm548 = vcmp.lt.s32.totalorder %v529, 0
    %v549 = vsub.s32 0, %v529
    %v550 = vsel %vm548, %v549, %v529
    %v551 = vshrl.u32 %v550, 3
    %v552 = vand.u32 %v550, 7
    %v553 = vsub.s32 0, %v552
    %v554 = vsel %vm548, %v553, %v552
    %vm555 = vcmp.lt.s32.totalorder %v530, 0
    %v556 = vsub.s32 0, %v530
    %v557 = vsel %vm555, %v556, %v530
    %v558 = vshrl.u32 %v557, 3
    %v559 = vand.u32 %v557, 7
    %v560 = vsub.s32 0, %v559
    %v561 = vsel %vm555, %v560, %v559
    %vm562 = vcmp.lt.s32.totalorder %v531, 0
    %v563 = vsub.s32 0, %v531
    %v564 = vsel %vm562, %v563, %v531
    %v565 = vshrl.u32 %v564, 3
    %v566 = vand.u32 %v564, 7
    %v567 = vsub.s32 0, %v566
    %v568 = vsel %vm562, %v567, %v566
    %vm569 = vcmp.lt.s32.totalorder %v532, 0
    %v570 = vsub.s32 0, %v532
    %v571 = vsel %vm569, %v570, %v532
    %v572 = vshrl.u32 %v571, 3
    %v573 = vand.u32 %v571, 7
    %v574 = vsub.s32 0, %v573
    %v575 = vsel %vm569, %v574, %v573
    %vm576 = vcmp.lt.s32.totalorder %v533, 0
    %v577 = vsub.s32 0, %v533
    %v578 = vsel %vm576, %v577, %v533
    %v579 = vshrl.u32 %v578, 3
    %v580 = vand.u32 %v578, 7
    %v581 = vsub.s32 0, %v580
    %v582 = vsel %vm576, %v581, %v580
    %vm583 = vcmp.ne.s32.totalorder %v540, 0
    %vm584 = vcmp.ne.s32.totalorder %v547, 0
    %vm585 = vcmp.ne.s32.totalorder %v554, 0
    %vm586 = vcmp.ne.s32.totalorder %v561, 0
    %vm587 = vcmp.ne.s32.totalorder %v568, 0
    %vm588 = vcmp.ne.s32.totalorder %v575, 0
    %vm589 = vcmp.ne.s32.totalorder %v582, 0
    %vm590 = vcmp.lt.s32.totalorder %v540, 0
    %vm591 = vcmp.lt.s32.totalorder %v547, 0
    %vm592 = vcmp.lt.s32.totalorder %v554, 0
    %vm593 = vcmp.lt.s32.totalorder %v561, 0
    %vm594 = vcmp.lt.s32.totalorder %v568, 0
    %vm595 = vcmp.lt.s32.totalorder %v575, 0
    %vm596 = vcmp.lt.s32.totalorder %v582, 0
    %vm597 = vmand %vm590, %vm583
    %vm598 = vmand %vm591, %vm584
    %vm599 = vmand %vm592, %vm585
    %vm600 = vmand %vm593, %vm586
    %vm601 = vmand %vm594, %vm587
    %vm602 = vmand %vm595, %vm588
    %vm603 = vmand %vm596, %vm589
    %v604 = vadd.s32 %v540, 8
    %v605 = vadd.s32 %v547, 8
    %v606 = vadd.s32 %v554, 8
    %v607 = vadd.s32 %v561, 8
    %v608 = vadd.s32 %v568, 8
    %v609 = vadd.s32 %v575, 8
    %v610 = vadd.s32 %v582, 8
    %v611 = vsel %vm597, %v604, %v540
    %v612 = vsel %vm598, %v605, %v547
    %v613 = vsel %vm599, %v606, %v554
    %v614 = vsel %vm600, %v607, %v561
    %v615 = vsel %vm601, %v608, %v568
    %v616 = vsel %vm602, %v609, %v575
    %v617 = vsel %vm603, %v610, %v582
    %vm618 = vcmp.ne.s32.totalorder %v611, 0
    %vm619 = vcmp.ne.s32.totalorder %v612, 0
    %vm620 = vcmp.ne.s32.totalorder %v613, 0
    %vm621 = vcmp.ne.s32.totalorder %v614, 0
    %vm622 = vcmp.ne.s32.totalorder %v615, 0
    %vm623 = vcmp.ne.s32.totalorder %v616, 0
    %v624 = vsel %vm618, 1, 0
    %v625 = vsel %vm619, 1, 0
    %v626 = vsel %vm620, 1, 0
    %v627 = vsel %vm621, 1, 0
    %v628 = vsel %vm622, 1, 0
    %v629 = vsel %vm623, 1, 0
    %v630 = vcvt.s32.f32 %v624
    %v631 = vcvt.s32.f32 %v625
    %v632 = vcvt.s32.f32 %v626
    %v633 = vcvt.s32.f32 %v627
    %v634 = vcvt.s32.f32 %v628
    %v635 = vcvt.s32.f32 %v629
    %v636 = vpack.c.bf16 %v631, %v630
    %v637 = vpack.c.bf16 %v633, %v632
    %v638 = vpack.c.bf16 %v635, %v634
    %v643 = vunpack.c.l.s4 839922192
    %v644 = vunpack.c.0.s8 %v643
    %v645 = vlaneseq
    %v646 = vshrl.u32 %v645, 7
    %v647 = vsub.s32 %v644, %v646
    %v648 = vrot.slane %v636, %v647
    %v650 = vunpack.c.l.s4 1985246804
    %v651 = vunpack.c.0.s8 %v650
    %v652 = vlaneseq
    %v653 = vshrl.u32 %v652, 7
    %v654 = vsub.s32 %v651, %v653
    %v655 = vrot.slane %v636, %v654
    %v657 = vunpack.c.l.s4 839922192
    %v658 = vunpack.c.0.s8 %v657
    %v659 = vlaneseq
    %v660 = vshrl.u32 %v659, 7
    %v661 = vsub.s32 %v658, %v660
    %v662 = vrot.slane %v637, %v661
    %v664 = vunpack.c.l.s4 1985246804
    %v665 = vunpack.c.0.s8 %v664
    %v666 = vlaneseq
    %v667 = vshrl.u32 %v666, 7
    %v668 = vsub.s32 %v665, %v667
    %v669 = vrot.slane %v637, %v668
    %v671 = vunpack.c.l.s4 839922192
    %v672 = vunpack.c.0.s8 %v671
    %v673 = vlaneseq
    %v674 = vshrl.u32 %v673, 7
    %v675 = vsub.s32 %v672, %v674
    %v676 = vrot.slane %v638, %v675
    %v678 = vunpack.c.l.s4 1985246804
    %v679 = vunpack.c.0.s8 %v678
    %v680 = vlaneseq
    %v681 = vshrl.u32 %v680, 7
    %v682 = vsub.s32 %v679, %v681
    %v683 = vrot.slane %v638, %v682
    %v690 = vmul.bf16 %v512, %v648
    %v691 = vmul.bf16 %v513, %v655
    %v692 = vmul.bf16 %v514, %v662
    %v693 = vmul.bf16 %v515, %v669
    %v694 = vmul.bf16 %v516, %v676
    %v695 = vmul.bf16 %v517, %v683
    %v696 = vmul.bf16 %v519, %v648
    %v697 = vmul.bf16 %v520, %v655
    %v698 = vmul.bf16 %v521, %v662
    %v699 = vmul.bf16 %v522, %v669
    %v700 = vmul.bf16 %v523, %v676
    %v701 = vmul.bf16 %v524, %v683
    %vm702 = vcmp.ne.s32.totalorder %v611, 1
    %vm703 = vcmp.ne.s32.totalorder %v612, 1
    %vm704 = vcmp.ne.s32.totalorder %v613, 1
    %vm705 = vcmp.ne.s32.totalorder %v614, 1
    %vm706 = vcmp.ne.s32.totalorder %v615, 1
    %vm707 = vcmp.ne.s32.totalorder %v616, 1
    %vm708 = vcmp.ne.s32.totalorder %v617, 1
    %v709 = vsel %vm702, 1, 0
    %v710 = vsel %vm703, 1, 0
    %v711 = vsel %vm704, 1, 0
    %v712 = vsel %vm705, 1, 0
    %v713 = vsel %vm706, 1, 0
    %v714 = vsel %vm707, 1, 0
    %v715 = vsel %vm708, 1, 0
    %v716 = vcvt.s32.f32 %v709
    %v717 = vcvt.s32.f32 %v710
    %v718 = vcvt.s32.f32 %v711
    %v719 = vcvt.s32.f32 %v712
    %v720 = vcvt.s32.f32 %v713
    %v721 = vcvt.s32.f32 %v714
    %v722 = vcvt.s32.f32 %v715
    %v723 = vpack.c.bf16 %v717, %v716
    %v724 = vpack.c.bf16 %v719, %v718
    %v725 = vpack.c.bf16 %v721, %v720
    %v726 = vpack.c.bf16 %v722, %v722
    %v732 = vunpack.c.l.s4 839922192
    %v733 = vunpack.c.0.s8 %v732
    %v734 = vlaneseq
    %v735 = vshrl.u32 %v734, 7
    %v736 = vsub.s32 %v733, %v735
    %v737 = vrot.slane %v723, %v736
    %v739 = vunpack.c.l.s4 1985246804
    %v740 = vunpack.c.0.s8 %v739
    %v741 = vlaneseq
    %v742 = vshrl.u32 %v741, 7
    %v743 = vsub.s32 %v740, %v742
    %v744 = vrot.slane %v723, %v743
    %v746 = vunpack.c.l.s4 839922192
    %v747 = vunpack.c.0.s8 %v746
    %v748 = vlaneseq
    %v749 = vshrl.u32 %v748, 7
    %v750 = vsub.s32 %v747, %v749
    %v751 = vrot.slane %v724, %v750
    %v753 = vunpack.c.l.s4 1985246804
    %v754 = vunpack.c.0.s8 %v753
    %v755 = vlaneseq
    %v756 = vshrl.u32 %v755, 7
    %v757 = vsub.s32 %v754, %v756
    %v758 = vrot.slane %v724, %v757
    %v760 = vunpack.c.l.s4 839922192
    %v761 = vunpack.c.0.s8 %v760
    %v762 = vlaneseq
    %v763 = vshrl.u32 %v762, 7
    %v764 = vsub.s32 %v761, %v763
    %v765 = vrot.slane %v725, %v764
    %v767 = vunpack.c.l.s4 1985246804
    %v768 = vunpack.c.0.s8 %v767
    %v769 = vlaneseq
    %v770 = vshrl.u32 %v769, 7
    %v771 = vsub.s32 %v768, %v770
    %v772 = vrot.slane %v725, %v771
    %v774 = vunpack.c.l.s4 839922192
    %v775 = vunpack.c.0.s8 %v774
    %v776 = vlaneseq
    %v777 = vshrl.u32 %v776, 7
    %v778 = vsub.s32 %v775, %v777
    %v779 = vrot.slane %v726, %v778
    %v787 = vmul.bf16 %v512, %v737
    %v788 = vmul.bf16 %v513, %v744
    %v789 = vmul.bf16 %v514, %v751
    %v790 = vmul.bf16 %v515, %v758
    %v791 = vmul.bf16 %v516, %v765
    %v792 = vmul.bf16 %v517, %v772
    %v793 = vmul.bf16 %v518, %v779
    %v794 = vmul.bf16 %v519, %v737
    %v795 = vmul.bf16 %v520, %v744
    %v796 = vmul.bf16 %v521, %v751
    %v797 = vmul.bf16 %v522, %v758
    %v798 = vmul.bf16 %v523, %v765
    %v799 = vmul.bf16 %v524, %v772
    %v800 = vmul.bf16 %v525, %v779
    %v801 = vld [vmem:[%s11] sm:$0xf]
    %v802 = vld [vmem:[%s11 + $0x4] sm:$0xf]
    %v803 = vld [vmem:[%s11 + $0x8] sm:$0xf]
    %v804 = vld [vmem:[%s11 + $0xc] sm:$0xf]
    %vm805 = vsmask.f32 3328
    %vm806 = vsmask.f32 7440
    %vm807 = vmor %vm805, %vm806
    %v809 = vshrl.u32 %v512, 16
    %v811 = vrot.slane %v809, 4
    %v812 = vshll.u32 %v512, 16
    %v814 = vrot.slane %v812, 5
    %v815 = vor.u32 %v811, %v814
    %v816 = vrot.slane %v815, 4
    %v818 = vshll.u32 %v513, 16
    %v820 = vrot.slane %v818, 5
    %v821 = vsel %vm807, %v816, %v820
    %v822 = vshrl.u32 %v513, 16
    %v824 = vrot.slane %v822, 4
    %v825 = vor.u32 %v824, %v820
    %v826 = vrot.slane %v825, 4
    %v828 = vshll.u32 %v514, 16
    %v830 = vrot.slane %v828, 5
    %v831 = vsel %vm807, %v826, %v830
    %v832 = vshrl.u32 %v514, 16
    %v834 = vrot.slane %v832, 4
    %v835 = vor.u32 %v834, %v830
    %v836 = vrot.slane %v835, 4
    %v838 = vshll.u32 %v515, 16
    %v840 = vrot.slane %v838, 5
    %v841 = vsel %vm807, %v836, %v840
    %v842 = vshrl.u32 %v515, 16
    %v844 = vrot.slane %v842, 4
    %v845 = vor.u32 %v844, %v840
    %v846 = vrot.slane %v845, 4
    %v848 = vshll.u32 %v516, 16
    %v850 = vrot.slane %v848, 5
    %v851 = vsel %vm807, %v846, %v850
    %v853 = vshrl.u32 %v519, 16
    %v855 = vrot.slane %v853, 4
    %v856 = vshll.u32 %v519, 16
    %v858 = vrot.slane %v856, 5
    %v859 = vor.u32 %v855, %v858
    %v860 = vrot.slane %v859, 4
    %v862 = vshll.u32 %v520, 16
    %v864 = vrot.slane %v862, 5
    %v865 = vsel %vm807, %v860, %v864
    %v866 = vshrl.u32 %v520, 16
    %v868 = vrot.slane %v866, 4
    %v869 = vor.u32 %v868, %v864
    %v870 = vrot.slane %v869, 4
    %v872 = vshll.u32 %v521, 16
    %v874 = vrot.slane %v872, 5
    %v875 = vsel %vm807, %v870, %v874
    %v876 = vshrl.u32 %v521, 16
    %v878 = vrot.slane %v876, 4
    %v879 = vor.u32 %v878, %v874
    %v880 = vrot.slane %v879, 4
    %v882 = vshll.u32 %v522, 16
    %v884 = vrot.slane %v882, 5
    %v885 = vsel %vm807, %v880, %v884
    %v886 = vshrl.u32 %v522, 16
    %v888 = vrot.slane %v886, 4
    %v889 = vor.u32 %v888, %v884
    %v890 = vrot.slane %v889, 4
    %v892 = vshll.u32 %v523, 16
    %v894 = vrot.slane %v892, 5
    %v895 = vsel %vm807, %v890, %v894
    %s896 = scalar_lea.vmem %s11, 16
    %v897 = vld [vmem:[%s896] sm:$0xf]
    %v898 = vld [vmem:[%s896 + $0x4] sm:$0xf]
    %v899 = vld [vmem:[%s896 + $0x8] sm:$0xf]
    %v900 = vld [vmem:[%s896 + $0xc] sm:$0xf]
    %v901 = vunpack.c.l.b16 %v821
    %v902 = vunpack.c.l.b16 %v831
    %v903 = vunpack.c.l.b16 %v841
    %v904 = vunpack.c.l.b16 %v851
    %v905 = vunpack.c.l.b16 %v865
    %v906 = vunpack.c.l.b16 %v875
    %v907 = vunpack.c.l.b16 %v885
    %v908 = vunpack.c.l.b16 %v895
    %v909 = vpack.c.b16 %v902, %v901
    %v910 = vpack.c.b16 %v904, %v903
    %v911 = vpack.c.b16 %v906, %v905
    %v912 = vpack.c.b16 %v908, %v907
    %v917 = vunpack.c.l.b16 %v897
    %v918 = vunpack.c.l.b16 %v898
    %v919 = vunpack.c.l.b16 %v899
    %v920 = vunpack.c.l.b16 %v900
    %v921 = vpack.c.b16 %v918, %v917
    %v922 = vpack.c.b16 %v920, %v919
    %v926 = vsel %vm127, %v909, 0
    %v929 = vsel %vm127, %v910, 0
    %v932 = vsel %vm127, %v911, 0
    %v935 = vsel %vm127, %v912, 0
    %937 = vmatprep.subr.bf16.mxu0 0
    %938 = vmatpush1.bf16.msra.mxu0 %v921
    %939 = vmatprep.subr.bf16.mxu0 0
    %940 = vmatpush1.bf16.msra.mxu0 %v922
    %941 = vmatprep.subr.bf16.mxu0 0
    %942 = vmatpush1.bf16.msra.mxu0 0
    %943 = vmatprep.subr.bf16.mxu0 0
    %944 = vmatpush1.bf16.msra.mxu0 0
    %945 = vmatprep.subr.bf16.mxu0 0
    %946 = vmatpush1.bf16.msra.mxu0 0
    %947 = vmatprep.subr.bf16.mxu0 0
    %948 = vmatpush1.bf16.msra.mxu0 0
    %949 = vmatprep.subr.bf16.mxu0 0
    %950 = vmatpush1.bf16.msra.mxu0 0
    %951 = vmatprep.subr.bf16.mxu0 0
    %952 = vmatpush1.bf16.msra.mxu0 0
    %953 = vmatprep.subr.bf16.mxu0 0
    %954 = vmatpush1.bf16.msra.mxu0 0
    %955 = vmatprep.subr.bf16.mxu0 0
    %956 = vmatpush1.bf16.msra.mxu0 0
    %957 = vmatprep.subr.bf16.mxu0 0
    %958 = vmatpush1.bf16.msra.mxu0 0
    %959 = vmatprep.subr.bf16.mxu0 0
    %960 = vmatpush1.bf16.msra.mxu0 0
    %961 = vmatprep.subr.bf16.mxu0 0
    %962 = vmatpush1.bf16.msra.mxu0 0
    %963 = vmatprep.subr.bf16.mxu0 0
    %964 = vmatpush1.bf16.msra.mxu0 0
    %965 = vmatprep.subr.bf16.mxu0 0
    %966 = vmatpush1.bf16.msra.mxu0 0
    %967 = vmatprep.subr.bf16.mxu0 0
    %968 = vmatpush1.bf16.msra.mxu0 0
    %969 = vmatprep.mubr.bf16.mxu0 0
    %970 = vmatmul.mubr.bf16.gmra.mrb[0].mxu0 %v926
    %v971 = vpop.f32.mrb[0].mxu0
    %v972 = vadd.f32 0.0, %v971
    %v973 = vpop.f32.mrb[0].mxu0
    %v974 = vpop.f32.mrb[0].mxu0
    %v975 = vadd.f32 0.0, %v974
    %v976 = vpop.f32.mrb[0].mxu0
    %977 = vmatprep.mubr.bf16.mxu0 0
    %978 = vmatmul.mubr.bf16.gmra.mrb[0].mxu0 %v929
    %v979 = vpop.f32.mrb[0].mxu0
    %v980 = vadd.f32 0.0, %v979
    %v981 = vpop.f32.mrb[0].mxu0
    %v982 = vpop.f32.mrb[0].mxu0
    %v983 = vadd.f32 0.0, %v982
    %v984 = vpop.f32.mrb[0].mxu0
    %985 = vmatprep.mubr.bf16.mxu0 0
    %986 = vmatmul.mubr.bf16.gmra.mrb[0].mxu0 %v932
    %v987 = vpop.f32.mrb[0].mxu0
    %v988 = vadd.f32 0.0, %v987
    %v989 = vpop.f32.mrb[0].mxu0
    %v990 = vpop.f32.mrb[0].mxu0
    %v991 = vadd.f32 0.0, %v990
    %v992 = vpop.f32.mrb[0].mxu0
    %993 = vmatprep.mubr.bf16.mxu0 0
    %994 = vmatmul.mubr.bf16.gmra.mrb[0].mxu0 %v935
    %v995 = vpop.f32.mrb[0].mxu0
    %v996 = vadd.f32 0.0, %v995
    %v997 = vpop.f32.mrb[0].mxu0
    %v998 = vpop.f32.mrb[0].mxu0
    %v999 = vadd.f32 0.0, %v998
    %v1000 = vpop.f32.mrb[0].mxu0
    %1001 = vdwg.mxu0
    %v1010 = vunpack.c.l.b16 %v690
    %v1011 = vunpack.c.l.b16 %v691
    %v1012 = vunpack.c.l.b16 %v692
    %v1013 = vunpack.c.l.b16 %v693
    %v1014 = vunpack.c.l.b16 %v696
    %v1015 = vunpack.c.l.b16 %v697
    %v1016 = vunpack.c.l.b16 %v698
    %v1017 = vunpack.c.l.b16 %v699
    %v1018 = vpack.c.b16 %v1011, %v1010
    %v1019 = vpack.c.b16 %v1013, %v1012
    %v1020 = vpack.c.b16 %v1015, %v1014
    %v1021 = vpack.c.b16 %v1017, %v1016
    %v1026 = vunpack.c.l.b16 %v801
    %v1027 = vunpack.c.l.b16 %v802
    %v1028 = vunpack.c.l.b16 %v803
    %v1029 = vunpack.c.l.b16 %v804
    %v1030 = vpack.c.b16 %v1027, %v1026
    %v1031 = vpack.c.b16 %v1029, %v1028
    %v1035 = vsel %vm127, %v1018, 0
    %v1038 = vsel %vm127, %v1019, 0
    %v1041 = vsel %vm127, %v1020, 0
    %v1044 = vsel %vm127, %v1021, 0
    %1046 = vmatprep.subr.bf16.mxu0 0
    %1047 = vmatpush1.bf16.msra.mxu0 %v1030
    %1048 = vmatprep.subr.bf16.mxu0 0
    %1049 = vmatpush1.bf16.msra.mxu0 %v1031
    %1050 = vmatprep.subr.bf16.mxu0 0
    %1051 = vmatpush1.bf16.msra.mxu0 0
    %1052 = vmatprep.subr.bf16.mxu0 0
    %1053 = vmatpush1.bf16.msra.mxu0 0
    %1054 = vmatprep.subr.bf16.mxu0 0
    %1055 = vmatpush1.bf16.msra.mxu0 0
    %1056 = vmatprep.subr.bf16.mxu0 0
    %1057 = vmatpush1.bf16.msra.mxu0 0
    %1058 = vmatprep.subr.bf16.mxu0 0
    %1059 = vmatpush1.bf16.msra.mxu0 0
    %1060 = vmatprep.subr.bf16.mxu0 0
    %1061 = vmatpush1.bf16.msra.mxu0 0
    %1062 = vmatprep.subr.bf16.mxu0 0
    %1063 = vmatpush1.bf16.msra.mxu0 0
    %1064 = vmatprep.subr.bf16.mxu0 0
    %1065 = vmatpush1.bf16.msra.mxu0 0
    %1066 = vmatprep.subr.bf16.mxu0 0
    %1067 = vmatpush1.bf16.msra.mxu0 0
    %1068 = vmatprep.subr.bf16.mxu0 0
    %1069 = vmatpush1.bf16.msra.mxu0 0
    %1070 = vmatprep.subr.bf16.mxu0 0
    %1071 = vmatpush1.bf16.msra.mxu0 0
    %1072 = vmatprep.subr.bf16.mxu0 0
    %1073 = vmatpush1.bf16.msra.mxu0 0
    %1074 = vmatprep.subr.bf16.mxu0 0
    %1075 = vmatpush1.bf16.msra.mxu0 0
    %1076 = vmatprep.subr.bf16.mxu0 0
    %1077 = vmatpush1.bf16.msra.mxu0 0
    %1078 = vmatprep.mubr.bf16.mxu0 0
    %1079 = vmatmul.mubr.bf16.gmra.mrb[0].mxu0 %v1035
    %v1080 = vpop.f32.mrb[0].mxu0
    %v1081 = vadd.f32 %v972, %v1080
    %v1082 = vpop.f32.mrb[0].mxu0
    %v1083 = vpop.f32.mrb[0].mxu0
    %v1084 = vadd.f32 %v975, %v1083
    %v1085 = vpop.f32.mrb[0].mxu0
    %1086 = vmatprep.mubr.bf16.mxu0 0
    %1087 = vmatmul.mubr.bf16.gmra.mrb[0].mxu0 %v1038
    %v1088 = vpop.f32.mrb[0].mxu0
    %v1089 = vadd.f32 %v980, %v1088
    %v1090 = vpop.f32.mrb[0].mxu0
    %v1091 = vpop.f32.mrb[0].mxu0
    %v1092 = vadd.f32 %v983, %v1091
    %v1093 = vpop.f32.mrb[0].mxu0
    %1094 = vmatprep.mubr.bf16.mxu0 0
    %1095 = vmatmul.mubr.bf16.gmra.mrb[0].mxu0 %v1041
    %v1096 = vpop.f32.mrb[0].mxu0
    %v1097 = vadd.f32 %v988, %v1096
    %v1098 = vpop.f32.mrb[0].mxu0
    %v1099 = vpop.f32.mrb[0].mxu0
    %v1100 = vadd.f32 %v991, %v1099
    %v1101 = vpop.f32.mrb[0].mxu0
    %1102 = vmatprep.mubr.bf16.mxu0 0
    %1103 = vmatmul.mubr.bf16.gmra.mrb[0].mxu0 %v1044
    %v1104 = vpop.f32.mrb[0].mxu0
    %v1105 = vadd.f32 %v996, %v1104
    %v1106 = vpop.f32.mrb[0].mxu0
    %v1107 = vpop.f32.mrb[0].mxu0
    %v1108 = vadd.f32 %v999, %v1107
    %v1109 = vpop.f32.mrb[0].mxu0
    %1110 = vdwg.mxu0
    %vm1121 = vcmask 1042432
    %vm1122 = vcmask 1046532
    %vm1123 = vmor %vm1121, %vm1122
    %v1124 = vrot.slane %v787, 5
    %v1125 = vrot.slane %v1124, 4
    %v1126 = vrot.slane %v788, 5
    %v1127 = vsel %vm1123, %v1125, %v1126
    %v1128 = vrot.slane %v1126, 4
    %v1129 = vrot.slane %v789, 5
    %v1130 = vsel %vm1123, %v1128, %v1129
    %v1131 = vrot.slane %v1129, 4
    %v1132 = vrot.slane %v790, 5
    %v1133 = vsel %vm1123, %v1131, %v1132
    %v1134 = vrot.slane %v1132, 4
    %v1135 = vrot.slane %v791, 5
    %v1136 = vsel %vm1123, %v1134, %v1135
    %v1137 = vrot.slane %v794, 5
    %v1138 = vrot.slane %v1137, 4
    %v1139 = vrot.slane %v795, 5
    %v1140 = vsel %vm1123, %v1138, %v1139
    %v1141 = vrot.slane %v1139, 4
    %v1142 = vrot.slane %v796, 5
    %v1143 = vsel %vm1123, %v1141, %v1142
    %v1144 = vrot.slane %v1142, 4
    %v1145 = vrot.slane %v797, 5
    %v1146 = vsel %vm1123, %v1144, %v1145
    %v1147 = vrot.slane %v1145, 4
    %v1148 = vrot.slane %v798, 5
    %v1149 = vsel %vm1123, %v1147, %v1148
    %s1150 = scalar_lea.vmem %s11, 32
    %v1151 = vld [vmem:[%s1150] sm:$0xf]
    %v1152 = vld [vmem:[%s1150 + $0x4] sm:$0xf]
    %v1153 = vld [vmem:[%s1150 + $0x8] sm:$0xf]
    %v1154 = vld [vmem:[%s1150 + $0xc] sm:$0xf]
    %v1155 = vunpack.c.l.b16 %v1127
    %v1156 = vunpack.c.l.b16 %v1130
    %v1157 = vunpack.c.l.b16 %v1133
    %v1158 = vunpack.c.l.b16 %v1136
    %v1159 = vunpack.c.l.b16 %v1140
    %v1160 = vunpack.c.l.b16 %v1143
    %v1161 = vunpack.c.l.b16 %v1146
    %v1162 = vunpack.c.l.b16 %v1149
    %v1163 = vpack.c.b16 %v1156, %v1155
    %v1164 = vpack.c.b16 %v1158, %v1157
    %v1165 = vpack.c.b16 %v1160, %v1159
    %v1166 = vpack.c.b16 %v1162, %v1161
    %v1171 = vunpack.c.l.b16 %v1151
    %v1172 = vunpack.c.l.b16 %v1152
    %v1173 = vunpack.c.l.b16 %v1153
    %v1174 = vunpack.c.l.b16 %v1154
    %v1175 = vpack.c.b16 %v1172, %v1171
    %v1176 = vpack.c.b16 %v1174, %v1173
    %v1180 = vsel %vm127, %v1163, 0
    %v1183 = vsel %vm127, %v1164, 0
    %v1186 = vsel %vm127, %v1165, 0
    %v1189 = vsel %vm127, %v1166, 0
    %1191 = vmatprep.subr.bf16.mxu0 0
    %1192 = vmatpush1.bf16.msra.mxu0 %v1175
    %1193 = vmatprep.subr.bf16.mxu0 0
    %1194 = vmatpush1.bf16.msra.mxu0 %v1176
    %1195 = vmatprep.subr.bf16.mxu0 0
    %1196 = vmatpush1.bf16.msra.mxu0 0
    %1197 = vmatprep.subr.bf16.mxu0 0
    %1198 = vmatpush1.bf16.msra.mxu0 0
    %1199 = vmatprep.subr.bf16.mxu0 0
    %1200 = vmatpush1.bf16.msra.mxu0 0
    %1201 = vmatprep.subr.bf16.mxu0 0
    %1202 = vmatpush1.bf16.msra.mxu0 0
    %1203 = vmatprep.subr.bf16.mxu0 0
    %1204 = vmatpush1.bf16.msra.mxu0 0
    %1205 = vmatprep.subr.bf16.mxu0 0
    %1206 = vmatpush1.bf16.msra.mxu0 0
    %1207 = vmatprep.subr.bf16.mxu0 0
    %1208 = vmatpush1.bf16.msra.mxu0 0
    %1209 = vmatprep.subr.bf16.mxu0 0
    %1210 = vmatpush1.bf16.msra.mxu0 0
    %1211 = vmatprep.subr.bf16.mxu0 0
    %1212 = vmatpush1.bf16.msra.mxu0 0
    %1213 = vmatprep.subr.bf16.mxu0 0
    %1214 = vmatpush1.bf16.msra.mxu0 0
    %1215 = vmatprep.subr.bf16.mxu0 0
    %1216 = vmatpush1.bf16.msra.mxu0 0
    %1217 = vmatprep.subr.bf16.mxu0 0
    %1218 = vmatpush1.bf16.msra.mxu0 0
    %1219 = vmatprep.subr.bf16.mxu0 0
    %1220 = vmatpush1.bf16.msra.mxu0 0
    %1221 = vmatprep.subr.bf16.mxu0 0
    %1222 = vmatpush1.bf16.msra.mxu0 0
    %1223 = vmatprep.mubr.bf16.mxu0 0
    %1224 = vmatmul.mubr.bf16.gmra.mrb[0].mxu0 %v1180
    %v1225 = vpop.f32.mrb[0].mxu0
    %v1226 = vadd.f32 0.0, %v1225
    %v1227 = vpop.f32.mrb[0].mxu0
    %v1228 = vpop.f32.mrb[0].mxu0
    %v1229 = vadd.f32 0.0, %v1228
    %v1230 = vpop.f32.mrb[0].mxu0
    %1231 = vmatprep.mubr.bf16.mxu0 0
    %1232 = vmatmul.mubr.bf16.gmra.mrb[0].mxu0 %v1183
    %v1233 = vpop.f32.mrb[0].mxu0
    %v1234 = vadd.f32 0.0, %v1233
    %v1235 = vpop.f32.mrb[0].mxu0
    %v1236 = vpop.f32.mrb[0].mxu0
    %v1237 = vadd.f32 0.0, %v1236
    %v1238 = vpop.f32.mrb[0].mxu0
    %1239 = vmatprep.mubr.bf16.mxu0 0
    %1240 = vmatmul.mubr.bf16.gmra.mrb[0].mxu0 %v1186
    %v1241 = vpop.f32.mrb[0].mxu0
    %v1242 = vadd.f32 0.0, %v1241
    %v1243 = vpop.f32.mrb[0].mxu0
    %v1244 = vpop.f32.mrb[0].mxu0
    %v1245 = vadd.f32 0.0, %v1244
    %v1246 = vpop.f32.mrb[0].mxu0
    %1247 = vmatprep.mubr.bf16.mxu0 0
    %1248 = vmatmul.mubr.bf16.gmra.mrb[0].mxu0 %v1189
    %v1249 = vpop.f32.mrb[0].mxu0
    %v1250 = vadd.f32 0.0, %v1249
    %v1251 = vpop.f32.mrb[0].mxu0
    %v1252 = vpop.f32.mrb[0].mxu0
    %v1253 = vadd.f32 0.0, %v1252
    %v1254 = vpop.f32.mrb[0].mxu0
    %1255 = vdwg.mxu0
    %v1256 = vadd.f32 %v1081, %v1226
    %v1257 = vadd.f32 %v1084, %v1229
    %v1258 = vadd.f32 %v1089, %v1234
    %v1259 = vadd.f32 %v1092, %v1237
    %v1260 = vadd.f32 %v1097, %v1242
    %v1261 = vadd.f32 %v1100, %v1245
    %v1262 = vadd.f32 %v1105, %v1250
    %v1263 = vadd.f32 %v1108, %v1253
    %s1264 = scalar_lea.vmem %s11, 48
    %v1265 = vld [vmem:[%s1264] sm:$0xf]
    %v1266 = vld [vmem:[%s1264 + $0x4] sm:$0xf]
    %v1267 = vld [vmem:[%s1264 + $0x8] sm:$0xf]
    %v1268 = vld [vmem:[%s1264 + $0xc] sm:$0xf]
    %v1271 = vunpack.c.l.b16 %v694
    %v1272 = vunpack.c.l.b16 %v700
    %v1273 = vpack.c.b16 %v1012, %v1011
    %v1274 = vpack.c.b16 %v1271, %v1013
    %v1275 = vpack.c.b16 %v1016, %v1015
    %v1276 = vpack.c.b16 %v1272, %v1017
    %v1281 = vunpack.c.l.b16 %v1265
    %v1282 = vunpack.c.l.b16 %v1266
    %v1283 = vunpack.c.l.b16 %v1267
    %v1284 = vunpack.c.l.b16 %v1268
    %v1285 = vpack.c.b16 %v1282, %v1281
    %v1286 = vpack.c.b16 %v1284, %v1283
    %v1290 = vsel %vm127, %v1273, 0
    %v1293 = vsel %vm127, %v1274, 0
    %v1296 = vsel %vm127, %v1275, 0
    %v1299 = vsel %vm127, %v1276, 0
    %1301 = vmatprep.subr.bf16.mxu0 0
    %1302 = vmatpush1.bf16.msra.mxu0 %v1285
    %1303 = vmatprep.subr.bf16.mxu0 0
    %1304 = vmatpush1.bf16.msra.mxu0 %v1286
    %1305 = vmatprep.subr.bf16.mxu0 0
    %1306 = vmatpush1.bf16.msra.mxu0 0
    %1307 = vmatprep.subr.bf16.mxu0 0
    %1308 = vmatpush1.bf16.msra.mxu0 0
    %1309 = vmatprep.subr.bf16.mxu0 0
    %1310 = vmatpush1.bf16.msra.mxu0 0
    %1311 = vmatprep.subr.bf16.mxu0 0
    %1312 = vmatpush1.bf16.msra.mxu0 0
    %1313 = vmatprep.subr.bf16.mxu0 0
    %1314 = vmatpush1.bf16.msra.mxu0 0
    %1315 = vmatprep.subr.bf16.mxu0 0
    %1316 = vmatpush1.bf16.msra.mxu0 0
    %1317 = vmatprep.subr.bf16.mxu0 0
    %1318 = vmatpush1.bf16.msra.mxu0 0
    %1319 = vmatprep.subr.bf16.mxu0 0
    %1320 = vmatpush1.bf16.msra.mxu0 0
    %1321 = vmatprep.subr.bf16.mxu0 0
    %1322 = vmatpush1.bf16.msra.mxu0 0
    %1323 = vmatprep.subr.bf16.mxu0 0
    %1324 = vmatpush1.bf16.msra.mxu0 0
    %1325 = vmatprep.subr.bf16.mxu0 0
    %1326 = vmatpush1.bf16.msra.mxu0 0
    %1327 = vmatprep.subr.bf16.mxu0 0
    %1328 = vmatpush1.bf16.msra.mxu0 0
    %1329 = vmatprep.subr.bf16.mxu0 0
    %1330 = vmatpush1.bf16.msra.mxu0 0
    %1331 = vmatprep.subr.bf16.mxu0 0
    %1332 = vmatpush1.bf16.msra.mxu0 0
    %1333 = vmatprep.mubr.bf16.mxu0 0
    %1334 = vmatmul.mubr.bf16.gmra.mrb[0].mxu0 %v1290
    %v1335 = vpop.f32.mrb[0].mxu0
    %v1336 = vadd.f32 0.0, %v1335
    %v1337 = vpop.f32.mrb[0].mxu0
    %v1338 = vpop.f32.mrb[0].mxu0
    %v1339 = vadd.f32 0.0, %v1338
    %v1340 = vpop.f32.mrb[0].mxu0
    %1341 = vmatprep.mubr.bf16.mxu0 0
    %1342 = vmatmul.mubr.bf16.gmra.mrb[0].mxu0 %v1293
    %v1343 = vpop.f32.mrb[0].mxu0
    %v1344 = vadd.f32 0.0, %v1343
    %v1345 = vpop.f32.mrb[0].mxu0
    %v1346 = vpop.f32.mrb[0].mxu0
    %v1347 = vadd.f32 0.0, %v1346
    %v1348 = vpop.f32.mrb[0].mxu0
    %1349 = vmatprep.mubr.bf16.mxu0 0
    %1350 = vmatmul.mubr.bf16.gmra.mrb[0].mxu0 %v1296
    %v1351 = vpop.f32.mrb[0].mxu0
    %v1352 = vadd.f32 0.0, %v1351
    %v1353 = vpop.f32.mrb[0].mxu0
    %v1354 = vpop.f32.mrb[0].mxu0
    %v1355 = vadd.f32 0.0, %v1354
    %v1356 = vpop.f32.mrb[0].mxu0
    %1357 = vmatprep.mubr.bf16.mxu0 0
    %1358 = vmatmul.mubr.bf16.gmra.mrb[0].mxu0 %v1299
    %v1359 = vpop.f32.mrb[0].mxu0
    %v1360 = vadd.f32 0.0, %v1359
    %v1361 = vpop.f32.mrb[0].mxu0
    %v1362 = vpop.f32.mrb[0].mxu0
    %v1363 = vadd.f32 0.0, %v1362
    %v1364 = vpop.f32.mrb[0].mxu0
    %1365 = vdwg.mxu0
    %v1366 = vadd.f32 %v1256, %v1336
    %v1367 = vadd.f32 %v1257, %v1339
    %v1368 = vadd.f32 %v1258, %v1344
    %v1369 = vadd.f32 %v1259, %v1347
    %v1370 = vadd.f32 %v1260, %v1352
    %v1371 = vadd.f32 %v1261, %v1355
    %v1372 = vadd.f32 %v1262, %v1360
    %v1373 = vadd.f32 %v1263, %v1363
    %v1374 = vshrl.u32 %v516, 16
    %v1376 = vrot.slane %v1374, 4
    %v1377 = vor.u32 %v1376, %v850
    %v1378 = vrot.slane %v1377, 4
    %v1380 = vshll.u32 %v517, 16
    %v1382 = vrot.slane %v1380, 5
    %v1383 = vsel %vm807, %v1378, %v1382
    %v1384 = vshrl.u32 %v523, 16
    %v1386 = vrot.slane %v1384, 4
    %v1387 = vor.u32 %v1386, %v894
    %v1388 = vrot.slane %v1387, 4
    %v1390 = vshll.u32 %v524, 16
    %v1392 = vrot.slane %v1390, 5
    %v1393 = vsel %vm807, %v1388, %v1392
    %s1394 = scalar_lea.vmem %s11, 64
    %v1395 = vld [vmem:[%s1394] sm:$0xf]
    %v1396 = vld [vmem:[%s1394 + $0x4] sm:$0xf]
    %v1397 = vld [vmem:[%s1394 + $0x8] sm:$0xf]
    %v1398 = vld [vmem:[%s1394 + $0xc] sm:$0xf]
    %v1399 = vunpack.c.l.b16 %v1383
    %v1400 = vunpack.c.l.b16 %v1393
    %v1401 = vpack.c.b16 %v903, %v902
    %v1402 = vpack.c.b16 %v1399, %v904
    %v1403 = vpack.c.b16 %v907, %v906
    %v1404 = vpack.c.b16 %v1400, %v908
    %v1409 = vunpack.c.l.b16 %v1395
    %v1410 = vunpack.c.l.b16 %v1396
    %v1411 = vunpack.c.l.b16 %v1397
    %v1412 = vunpack.c.l.b16 %v1398
    %v1413 = vpack.c.b16 %v1410, %v1409
    %v1414 = vpack.c.b16 %v1412, %v1411
    %v1418 = vsel %vm127, %v1401, 0
    %v1421 = vsel %vm127, %v1402, 0
    %v1424 = vsel %vm127, %v1403, 0
    %v1427 = vsel %vm127, %v1404, 0
    %1429 = vmatprep.subr.bf16.mxu0 0
    %1430 = vmatpush1.bf16.msra.mxu0 %v1413
    %1431 = vmatprep.subr.bf16.mxu0 0
    %1432 = vmatpush1.bf16.msra.mxu0 %v1414
    %1433 = vmatprep.subr.bf16.mxu0 0
    %1434 = vmatpush1.bf16.msra.mxu0 0
    %1435 = vmatprep.subr.bf16.mxu0 0
    %1436 = vmatpush1.bf16.msra.mxu0 0
    %1437 = vmatprep.subr.bf16.mxu0 0
    %1438 = vmatpush1.bf16.msra.mxu0 0
    %1439 = vmatprep.subr.bf16.mxu0 0
    %1440 = vmatpush1.bf16.msra.mxu0 0
    %1441 = vmatprep.subr.bf16.mxu0 0
    %1442 = vmatpush1.bf16.msra.mxu0 0
    %1443 = vmatprep.subr.bf16.mxu0 0
    %1444 = vmatpush1.bf16.msra.mxu0 0
    %1445 = vmatprep.subr.bf16.mxu0 0
    %1446 = vmatpush1.bf16.msra.mxu0 0
    %1447 = vmatprep.subr.bf16.mxu0 0
    %1448 = vmatpush1.bf16.msra.mxu0 0
    %1449 = vmatprep.subr.bf16.mxu0 0
    %1450 = vmatpush1.bf16.msra.mxu0 0
    %1451 = vmatprep.subr.bf16.mxu0 0
    %1452 = vmatpush1.bf16.msra.mxu0 0
    %1453 = vmatprep.subr.bf16.mxu0 0
    %1454 = vmatpush1.bf16.msra.mxu0 0
    %1455 = vmatprep.subr.bf16.mxu0 0
    %1456 = vmatpush1.bf16.msra.mxu0 0
    %1457 = vmatprep.subr.bf16.mxu0 0
    %1458 = vmatpush1.bf16.msra.mxu0 0
    %1459 = vmatprep.subr.bf16.mxu0 0
    %1460 = vmatpush1.bf16.msra.mxu0 0
    %1461 = vmatprep.mubr.bf16.mxu0 0
    %1462 = vmatmul.mubr.bf16.gmra.mrb[0].mxu0 %v1418
    %v1463 = vpop.f32.mrb[0].mxu0
    %v1464 = vadd.f32 0.0, %v1463
    %v1465 = vpop.f32.mrb[0].mxu0
    %v1466 = vpop.f32.mrb[0].mxu0
    %v1467 = vadd.f32 0.0, %v1466
    %v1468 = vpop.f32.mrb[0].mxu0
    %1469 = vmatprep.mubr.bf16.mxu0 0
    %1470 = vmatmul.mubr.bf16.gmra.mrb[0].mxu0 %v1421
    %v1471 = vpop.f32.mrb[0].mxu0
    %v1472 = vadd.f32 0.0, %v1471
    %v1473 = vpop.f32.mrb[0].mxu0
    %v1474 = vpop.f32.mrb[0].mxu0
    %v1475 = vadd.f32 0.0, %v1474
    %v1476 = vpop.f32.mrb[0].mxu0
    %1477 = vmatprep.mubr.bf16.mxu0 0
    %1478 = vmatmul.mubr.bf16.gmra.mrb[0].mxu0 %v1424
    %v1479 = vpop.f32.mrb[0].mxu0
    %v1480 = vadd.f32 0.0, %v1479
    %v1481 = vpop.f32.mrb[0].mxu0
    %v1482 = vpop.f32.mrb[0].mxu0
    %v1483 = vadd.f32 0.0, %v1482
    %v1484 = vpop.f32.mrb[0].mxu0
    %1485 = vmatprep.mubr.bf16.mxu0 0
    %1486 = vmatmul.mubr.bf16.gmra.mrb[0].mxu0 %v1427
    %v1487 = vpop.f32.mrb[0].mxu0
    %v1488 = vadd.f32 0.0, %v1487
    %v1489 = vpop.f32.mrb[0].mxu0
    %v1490 = vpop.f32.mrb[0].mxu0
    %v1491 = vadd.f32 0.0, %v1490
    %v1492 = vpop.f32.mrb[0].mxu0
    %1493 = vdwg.mxu0
    %v1494 = vadd.f32 %v1366, %v1464
    %v1495 = vadd.f32 %v1367, %v1467
    %v1496 = vadd.f32 %v1368, %v1472
    %v1497 = vadd.f32 %v1369, %v1475
    %v1498 = vadd.f32 %v1370, %v1480
    %v1499 = vadd.f32 %v1371, %v1483
    %v1500 = vadd.f32 %v1372, %v1488
    %v1501 = vadd.f32 %v1373, %v1491
    %v1504 = vrot.slane %v1135, 4
    %v1505 = vrot.slane %v792, 5
    %v1506 = vsel %vm1123, %v1504, %v1505
    %v1507 = vrot.slane %v1148, 4
    %v1508 = vrot.slane %v799, 5
    %v1509 = vsel %vm1123, %v1507, %v1508
    %s1510 = scalar_lea.vmem %s11, 80
    %v1511 = vld [vmem:[%s1510] sm:$0xf]
    %v1512 = vld [vmem:[%s1510 + $0x4] sm:$0xf]
    %v1513 = vld [vmem:[%s1510 + $0x8] sm:$0xf]
    %v1514 = vld [vmem:[%s1510 + $0xc] sm:$0xf]
    %v1515 = vunpack.c.l.b16 %v1506
    %v1516 = vunpack.c.l.b16 %v1509
    %v1517 = vpack.c.b16 %v1157, %v1156
    %v1518 = vpack.c.b16 %v1515, %v1158
    %v1519 = vpack.c.b16 %v1161, %v1160
    %v1520 = vpack.c.b16 %v1516, %v1162
    %v1525 = vunpack.c.l.b16 %v1511
    %v1526 = vunpack.c.l.b16 %v1512
    %v1527 = vunpack.c.l.b16 %v1513
    %v1528 = vunpack.c.l.b16 %v1514
    %v1529 = vpack.c.b16 %v1526, %v1525
    %v1530 = vpack.c.b16 %v1528, %v1527
    %v1534 = vsel %vm127, %v1517, 0
    %v1537 = vsel %vm127, %v1518, 0
    %v1540 = vsel %vm127, %v1519, 0
    %v1543 = vsel %vm127, %v1520, 0
    %1545 = vmatprep.subr.bf16.mxu0 0
    %1546 = vmatpush1.bf16.msra.mxu0 %v1529
    %1547 = vmatprep.subr.bf16.mxu0 0
    %1548 = vmatpush1.bf16.msra.mxu0 %v1530
    %1549 = vmatprep.subr.bf16.mxu0 0
    %1550 = vmatpush1.bf16.msra.mxu0 0
    %1551 = vmatprep.subr.bf16.mxu0 0
    %1552 = vmatpush1.bf16.msra.mxu0 0
    %1553 = vmatprep.subr.bf16.mxu0 0
    %1554 = vmatpush1.bf16.msra.mxu0 0
    %1555 = vmatprep.subr.bf16.mxu0 0
    %1556 = vmatpush1.bf16.msra.mxu0 0
    %1557 = vmatprep.subr.bf16.mxu0 0
    %1558 = vmatpush1.bf16.msra.mxu0 0
    %1559 = vmatprep.subr.bf16.mxu0 0
    %1560 = vmatpush1.bf16.msra.mxu0 0
    %1561 = vmatprep.subr.bf16.mxu0 0
    %1562 = vmatpush1.bf16.msra.mxu0 0
    %1563 = vmatprep.subr.bf16.mxu0 0
    %1564 = vmatpush1.bf16.msra.mxu0 0
    %1565 = vmatprep.subr.bf16.mxu0 0
    %1566 = vmatpush1.bf16.msra.mxu0 0
    %1567 = vmatprep.subr.bf16.mxu0 0
    %1568 = vmatpush1.bf16.msra.mxu0 0
    %1569 = vmatprep.subr.bf16.mxu0 0
    %1570 = vmatpush1.bf16.msra.mxu0 0
    %1571 = vmatprep.subr.bf16.mxu0 0
    %1572 = vmatpush1.bf16.msra.mxu0 0
    %1573 = vmatprep.subr.bf16.mxu0 0
    %1574 = vmatpush1.bf16.msra.mxu0 0
    %1575 = vmatprep.subr.bf16.mxu0 0
    %1576 = vmatpush1.bf16.msra.mxu0 0
    %1577 = vmatprep.mubr.bf16.mxu0 0
    %1578 = vmatmul.mubr.bf16.gmra.mrb[0].mxu0 %v1534
    %v1579 = vpop.f32.mrb[0].mxu0
    %v1580 = vadd.f32 0.0, %v1579
    %v1581 = vpop.f32.mrb[0].mxu0
    %v1582 = vpop.f32.mrb[0].mxu0
    %v1583 = vadd.f32 0.0, %v1582
    %v1584 = vpop.f32.mrb[0].mxu0
    %1585 = vmatprep.mubr.bf16.mxu0 0
    %1586 = vmatmul.mubr.bf16.gmra.mrb[0].mxu0 %v1537
    %v1587 = vpop.f32.mrb[0].mxu0
    %v1588 = vadd.f32 0.0, %v1587
    %v1589 = vpop.f32.mrb[0].mxu0
    %v1590 = vpop.f32.mrb[0].mxu0
    %v1591 = vadd.f32 0.0, %v1590
    %v1592 = vpop.f32.mrb[0].mxu0
    %1593 = vmatprep.mubr.bf16.mxu0 0
    %1594 = vmatmul.mubr.bf16.gmra.mrb[0].mxu0 %v1540
    %v1595 = vpop.f32.mrb[0].mxu0
    %v1596 = vadd.f32 0.0, %v1595
    %v1597 = vpop.f32.mrb[0].mxu0
    %v1598 = vpop.f32.mrb[0].mxu0
    %v1599 = vadd.f32 0.0, %v1598
    %v1600 = vpop.f32.mrb[0].mxu0
    %1601 = vmatprep.mubr.bf16.mxu0 0
    %1602 = vmatmul.mubr.bf16.gmra.mrb[0].mxu0 %v1543
    %v1603 = vpop.f32.mrb[0].mxu0
    %v1604 = vadd.f32 0.0, %v1603
    %v1605 = vpop.f32.mrb[0].mxu0
    %v1606 = vpop.f32.mrb[0].mxu0
    %v1607 = vadd.f32 0.0, %v1606
    %v1608 = vpop.f32.mrb[0].mxu0
    %1609 = vdwg.mxu0
    %v1610 = vadd.f32 %v1494, %v1580
    %v1611 = vadd.f32 %v1495, %v1583
    %v1612 = vadd.f32 %v1496, %v1588
    %v1613 = vadd.f32 %v1497, %v1591
    %v1614 = vadd.f32 %v1498, %v1596
    %v1615 = vadd.f32 %v1499, %v1599
    %v1616 = vadd.f32 %v1500, %v1604
    %v1617 = vadd.f32 %v1501, %v1607
    %s1618 = scalar_lea.vmem %s11, 96
    %v1619 = vld [vmem:[%s1618] sm:$0xf]
    %v1620 = vld [vmem:[%s1618 + $0x4] sm:$0xf]
    %v1621 = vld [vmem:[%s1618 + $0x8] sm:$0xf]
    %v1622 = vld [vmem:[%s1618 + $0xc] sm:$0xf]
    %v1625 = vunpack.c.l.b16 %v695
    %v1626 = vunpack.c.l.b16 %v701
    %v1627 = vpack.c.b16 %v1625, %v1271
    %v1628 = vpack.c.b16 %v1626, %v1272
    %v1633 = vunpack.c.l.b16 %v1619
    %v1634 = vunpack.c.l.b16 %v1620
    %v1635 = vunpack.c.l.b16 %v1621
    %v1636 = vunpack.c.l.b16 %v1622
    %v1637 = vpack.c.b16 %v1634, %v1633
    %v1638 = vpack.c.b16 %v1636, %v1635
    %v1642 = vsel %vm127, %v1627, 0
    %v1645 = vsel %vm127, %v1628, 0
    %1647 = vmatprep.subr.bf16.mxu0 0
    %1648 = vmatpush1.bf16.msra.mxu0 %v1637
    %1649 = vmatprep.subr.bf16.mxu0 0
    %1650 = vmatpush1.bf16.msra.mxu0 %v1638
    %1651 = vmatprep.subr.bf16.mxu0 0
    %1652 = vmatpush1.bf16.msra.mxu0 0
    %1653 = vmatprep.subr.bf16.mxu0 0
    %1654 = vmatpush1.bf16.msra.mxu0 0
    %1655 = vmatprep.subr.bf16.mxu0 0
    %1656 = vmatpush1.bf16.msra.mxu0 0
    %1657 = vmatprep.subr.bf16.mxu0 0
    %1658 = vmatpush1.bf16.msra.mxu0 0
    %1659 = vmatprep.subr.bf16.mxu0 0
    %1660 = vmatpush1.bf16.msra.mxu0 0
    %1661 = vmatprep.subr.bf16.mxu0 0
    %1662 = vmatpush1.bf16.msra.mxu0 0
    %1663 = vmatprep.subr.bf16.mxu0 0
    %1664 = vmatpush1.bf16.msra.mxu0 0
    %1665 = vmatprep.subr.bf16.mxu0 0
    %1666 = vmatpush1.bf16.msra.mxu0 0
    %1667 = vmatprep.subr.bf16.mxu0 0
    %1668 = vmatpush1.bf16.msra.mxu0 0
    %1669 = vmatprep.subr.bf16.mxu0 0
    %1670 = vmatpush1.bf16.msra.mxu0 0
    %1671 = vmatprep.subr.bf16.mxu0 0
    %1672 = vmatpush1.bf16.msra.mxu0 0
    %1673 = vmatprep.subr.bf16.mxu0 0
    %1674 = vmatpush1.bf16.msra.mxu0 0
    %1675 = vmatprep.subr.bf16.mxu0 0
    %1676 = vmatpush1.bf16.msra.mxu0 0
    %1677 = vmatprep.subr.bf16.mxu0 0
    %1678 = vmatpush1.bf16.msra.mxu0 0
    %1679 = vmatprep.mubr.bf16.mxu0 0
    %1680 = vmatmul.mubr.bf16.gmra.mrb[0].mxu0 %v1038
    %v1681 = vpop.f32.mrb[0].mxu0
    %v1682 = vadd.f32 0.0, %v1681
    %v1683 = vpop.f32.mrb[0].mxu0
    %v1684 = vpop.f32.mrb[0].mxu0
    %v1685 = vadd.f32 0.0, %v1684
    %v1686 = vpop.f32.mrb[0].mxu0
    %1687 = vmatprep.mubr.bf16.mxu0 0
    %1688 = vmatmul.mubr.bf16.gmra.mrb[0].mxu0 %v1642
    %v1689 = vpop.f32.mrb[0].mxu0
    %v1690 = vadd.f32 0.0, %v1689
    %v1691 = vpop.f32.mrb[0].mxu0
    %v1692 = vpop.f32.mrb[0].mxu0
    %v1693 = vadd.f32 0.0, %v1692
    %v1694 = vpop.f32.mrb[0].mxu0
    %1695 = vmatprep.mubr.bf16.mxu0 0
    %1696 = vmatmul.mubr.bf16.gmra.mrb[0].mxu0 %v1044
    %v1697 = vpop.f32.mrb[0].mxu0
    %v1698 = vadd.f32 0.0, %v1697
    %v1699 = vpop.f32.mrb[0].mxu0
    %v1700 = vpop.f32.mrb[0].mxu0
    %v1701 = vadd.f32 0.0, %v1700
    %v1702 = vpop.f32.mrb[0].mxu0
    %1703 = vmatprep.mubr.bf16.mxu0 0
    %1704 = vmatmul.mubr.bf16.gmra.mrb[0].mxu0 %v1645
    %v1705 = vpop.f32.mrb[0].mxu0
    %v1706 = vadd.f32 0.0, %v1705
    %v1707 = vpop.f32.mrb[0].mxu0
    %v1708 = vpop.f32.mrb[0].mxu0
    %v1709 = vadd.f32 0.0, %v1708
    %v1710 = vpop.f32.mrb[0].mxu0
    %1711 = vdwg.mxu0
    %v1712 = vadd.f32 %v1610, %v1682
    %v1713 = vadd.f32 %v1611, %v1685
    %v1714 = vadd.f32 %v1612, %v1690
    %v1715 = vadd.f32 %v1613, %v1693
    %v1716 = vadd.f32 %v1614, %v1698
    %v1717 = vadd.f32 %v1615, %v1701
    %v1718 = vadd.f32 %v1616, %v1706
    %v1719 = vadd.f32 %v1617, %v1709
    %v1720 = vshrl.u32 %v517, 16
    %v1722 = vrot.slane %v1720, 4
    %v1723 = vor.u32 %v1722, %v1382
    %v1724 = vrot.slane %v1723, 4
    %v1726 = vshll.u32 %v518, 16
    %v1728 = vrot.slane %v1726, 5
    %v1729 = vsel %vm807, %v1724, %v1728
    %v1730 = vshrl.u32 %v524, 16
    %v1732 = vrot.slane %v1730, 4
    %v1733 = vor.u32 %v1732, %v1392
    %v1734 = vrot.slane %v1733, 4
    %v1736 = vshll.u32 %v525, 16
    %v1738 = vrot.slane %v1736, 5
    %v1739 = vsel %vm807, %v1734, %v1738
    %s1740 = scalar_lea.vmem %s11, 112
    %v1741 = vld [vmem:[%s1740] sm:$0xf]
    %v1742 = vld [vmem:[%s1740 + $0x4] sm:$0xf]
    %v1743 = vld [vmem:[%s1740 + $0x8] sm:$0xf]
    %v1744 = vld [vmem:[%s1740 + $0xc] sm:$0xf]
    %v1745 = vunpack.c.l.b16 %v1729
    %v1746 = vunpack.c.l.b16 %v1739
    %v1747 = vpack.c.b16 %v1745, %v1399
    %v1748 = vpack.c.b16 %v1746, %v1400
    %v1753 = vunpack.c.l.b16 %v1741
    %v1754 = vunpack.c.l.b16 %v1742
    %v1755 = vunpack.c.l.b16 %v1743
    %v1756 = vunpack.c.l.b16 %v1744
    %v1757 = vpack.c.b16 %v1754, %v1753
    %v1758 = vpack.c.b16 %v1756, %v1755
    %v1762 = vsel %vm127, %v1747, 0
    %v1765 = vsel %vm127, %v1748, 0
    %1767 = vmatprep.subr.bf16.mxu0 0
    %1768 = vmatpush1.bf16.msra.mxu0 %v1757
    %1769 = vmatprep.subr.bf16.mxu0 0
    %1770 = vmatpush1.bf16.msra.mxu0 %v1758
    %1771 = vmatprep.subr.bf16.mxu0 0
    %1772 = vmatpush1.bf16.msra.mxu0 0
    %1773 = vmatprep.subr.bf16.mxu0 0
    %1774 = vmatpush1.bf16.msra.mxu0 0
    %1775 = vmatprep.subr.bf16.mxu0 0
    %1776 = vmatpush1.bf16.msra.mxu0 0
    %1777 = vmatprep.subr.bf16.mxu0 0
    %1778 = vmatpush1.bf16.msra.mxu0 0
    %1779 = vmatprep.subr.bf16.mxu0 0
    %1780 = vmatpush1.bf16.msra.mxu0 0
    %1781 = vmatprep.subr.bf16.mxu0 0
    %1782 = vmatpush1.bf16.msra.mxu0 0
    %1783 = vmatprep.subr.bf16.mxu0 0
    %1784 = vmatpush1.bf16.msra.mxu0 0
    %1785 = vmatprep.subr.bf16.mxu0 0
    %1786 = vmatpush1.bf16.msra.mxu0 0
    %1787 = vmatprep.subr.bf16.mxu0 0
    %1788 = vmatpush1.bf16.msra.mxu0 0
    %1789 = vmatprep.subr.bf16.mxu0 0
    %1790 = vmatpush1.bf16.msra.mxu0 0
    %1791 = vmatprep.subr.bf16.mxu0 0
    %1792 = vmatpush1.bf16.msra.mxu0 0
    %1793 = vmatprep.subr.bf16.mxu0 0
    %1794 = vmatpush1.bf16.msra.mxu0 0
    %1795 = vmatprep.subr.bf16.mxu0 0
    %1796 = vmatpush1.bf16.msra.mxu0 0
    %1797 = vmatprep.subr.bf16.mxu0 0
    %1798 = vmatpush1.bf16.msra.mxu0 0
    %1799 = vmatprep.mubr.bf16.mxu0 0
    %1800 = vmatmul.mubr.bf16.gmra.mrb[0].mxu0 %v929
    %v1801 = vpop.f32.mrb[0].mxu0
    %v1802 = vadd.f32 0.0, %v1801
    %v1803 = vpop.f32.mrb[0].mxu0
    %v1804 = vpop.f32.mrb[0].mxu0
    %v1805 = vadd.f32 0.0, %v1804
    %v1806 = vpop.f32.mrb[0].mxu0
    %1807 = vmatprep.mubr.bf16.mxu0 0
    %1808 = vmatmul.mubr.bf16.gmra.mrb[0].mxu0 %v1762
    %v1809 = vpop.f32.mrb[0].mxu0
    %v1810 = vadd.f32 0.0, %v1809
    %v1811 = vpop.f32.mrb[0].mxu0
    %v1812 = vpop.f32.mrb[0].mxu0
    %v1813 = vadd.f32 0.0, %v1812
    %v1814 = vpop.f32.mrb[0].mxu0
    %1815 = vmatprep.mubr.bf16.mxu0 0
    %1816 = vmatmul.mubr.bf16.gmra.mrb[0].mxu0 %v935
    %v1817 = vpop.f32.mrb[0].mxu0
    %v1818 = vadd.f32 0.0, %v1817
    %v1819 = vpop.f32.mrb[0].mxu0
    %v1820 = vpop.f32.mrb[0].mxu0
    %v1821 = vadd.f32 0.0, %v1820
    %v1822 = vpop.f32.mrb[0].mxu0
    %1823 = vmatprep.mubr.bf16.mxu0 0
    %1824 = vmatmul.mubr.bf16.gmra.mrb[0].mxu0 %v1765
    %v1825 = vpop.f32.mrb[0].mxu0
    %v1826 = vadd.f32 0.0, %v1825
    %v1827 = vpop.f32.mrb[0].mxu0
    %v1828 = vpop.f32.mrb[0].mxu0
    %v1829 = vadd.f32 0.0, %v1828
    %v1830 = vpop.f32.mrb[0].mxu0
    %1831 = vdwg.mxu0
    %v1832 = vadd.f32 %v1712, %v1802
    %v1833 = vadd.f32 %v1713, %v1805
    %v1834 = vadd.f32 %v1714, %v1810
    %v1835 = vadd.f32 %v1715, %v1813
    %v1836 = vadd.f32 %v1716, %v1818
    %v1837 = vadd.f32 %v1717, %v1821
    %v1838 = vadd.f32 %v1718, %v1826
    %v1839 = vadd.f32 %v1719, %v1829
    %v1842 = vrot.slane %v1505, 4
    %v1843 = vrot.slane %v793, 5
    %v1844 = vsel %vm1123, %v1842, %v1843
    %v1845 = vrot.slane %v1508, 4
    %v1846 = vrot.slane %v800, 5
    %v1847 = vsel %vm1123, %v1845, %v1846
    %s1848 = scalar_lea.vmem %s11, 128
    %v1849 = vld [vmem:[%s1848] sm:$0xf]
    %v1850 = vld [vmem:[%s1848 + $0x4] sm:$0xf]
    %v1851 = vld [vmem:[%s1848 + $0x8] sm:$0xf]
    %v1852 = vld [vmem:[%s1848 + $0xc] sm:$0xf]
    %v1853 = vunpack.c.l.b16 %v1844
    %v1854 = vunpack.c.l.b16 %v1847
    %v1855 = vpack.c.b16 %v1853, %v1515
    %v1856 = vpack.c.b16 %v1854, %v1516
    %v1861 = vunpack.c.l.b16 %v1849
    %v1862 = vunpack.c.l.b16 %v1850
    %v1863 = vunpack.c.l.b16 %v1851
    %v1864 = vunpack.c.l.b16 %v1852
    %v1865 = vpack.c.b16 %v1862, %v1861
    %v1866 = vpack.c.b16 %v1864, %v1863
    %v1870 = vsel %vm127, %v1855, 0
    %v1873 = vsel %vm127, %v1856, 0
    %1875 = vmatprep.subr.bf16.mxu0 0
    %1876 = vmatpush1.bf16.msra.mxu0 %v1865
    %1877 = vmatprep.subr.bf16.mxu0 0
    %1878 = vmatpush1.bf16.msra.mxu0 %v1866
    %1879 = vmatprep.subr.bf16.mxu0 0
    %1880 = vmatpush1.bf16.msra.mxu0 0
    %1881 = vmatprep.subr.bf16.mxu0 0
    %1882 = vmatpush1.bf16.msra.mxu0 0
    %1883 = vmatprep.subr.bf16.mxu0 0
    %1884 = vmatpush1.bf16.msra.mxu0 0
    %1885 = vmatprep.subr.bf16.mxu0 0
    %1886 = vmatpush1.bf16.msra.mxu0 0
    %1887 = vmatprep.subr.bf16.mxu0 0
    %1888 = vmatpush1.bf16.msra.mxu0 0
    %1889 = vmatprep.subr.bf16.mxu0 0
    %1890 = vmatpush1.bf16.msra.mxu0 0
    %1891 = vmatprep.subr.bf16.mxu0 0
    %1892 = vmatpush1.bf16.msra.mxu0 0
    %1893 = vmatprep.subr.bf16.mxu0 0
    %1894 = vmatpush1.bf16.msra.mxu0 0
    %1895 = vmatprep.subr.bf16.mxu0 0
    %1896 = vmatpush1.bf16.msra.mxu0 0
    %1897 = vmatprep.subr.bf16.mxu0 0
    %1898 = vmatpush1.bf16.msra.mxu0 0
    %1899 = vmatprep.subr.bf16.mxu0 0
    %1900 = vmatpush1.bf16.msra.mxu0 0
    %1901 = vmatprep.subr.bf16.mxu0 0
    %1902 = vmatpush1.bf16.msra.mxu0 0
    %1903 = vmatprep.subr.bf16.mxu0 0
    %1904 = vmatpush1.bf16.msra.mxu0 0
    %1905 = vmatprep.subr.bf16.mxu0 0
    %1906 = vmatpush1.bf16.msra.mxu0 0
    %1907 = vmatprep.mubr.bf16.mxu0 0
    %1908 = vmatmul.mubr.bf16.gmra.mrb[0].mxu0 %v1183
    %v1909 = vpop.f32.mrb[0].mxu0
    %v1910 = vadd.f32 0.0, %v1909
    %v1911 = vpop.f32.mrb[0].mxu0
    %v1912 = vpop.f32.mrb[0].mxu0
    %v1913 = vadd.f32 0.0, %v1912
    %v1914 = vpop.f32.mrb[0].mxu0
    %1915 = vmatprep.mubr.bf16.mxu0 0
    %1916 = vmatmul.mubr.bf16.gmra.mrb[0].mxu0 %v1870
    %v1917 = vpop.f32.mrb[0].mxu0
    %v1918 = vadd.f32 0.0, %v1917
    %v1919 = vpop.f32.mrb[0].mxu0
    %v1920 = vpop.f32.mrb[0].mxu0
    %v1921 = vadd.f32 0.0, %v1920
    %v1922 = vpop.f32.mrb[0].mxu0
    %1923 = vmatprep.mubr.bf16.mxu0 0
    %1924 = vmatmul.mubr.bf16.gmra.mrb[0].mxu0 %v1189
    %v1925 = vpop.f32.mrb[0].mxu0
    %v1926 = vadd.f32 0.0, %v1925
    %v1927 = vpop.f32.mrb[0].mxu0
    %v1928 = vpop.f32.mrb[0].mxu0
    %v1929 = vadd.f32 0.0, %v1928
    %v1930 = vpop.f32.mrb[0].mxu0
    %1931 = vmatprep.mubr.bf16.mxu0 0
    %1932 = vmatmul.mubr.bf16.gmra.mrb[0].mxu0 %v1873
    %v1933 = vpop.f32.mrb[0].mxu0
    %v1934 = vadd.f32 0.0, %v1933
    %v1935 = vpop.f32.mrb[0].mxu0
    %v1936 = vpop.f32.mrb[0].mxu0
    %v1937 = vadd.f32 0.0, %v1936
    %v1938 = vpop.f32.mrb[0].mxu0
    %1939 = vdwg.mxu0
    %v1940 = vadd.f32 %v1832, %v1910
    %v1941 = vadd.f32 %v1833, %v1913
    %v1942 = vadd.f32 %v1834, %v1918
    %v1943 = vadd.f32 %v1835, %v1921
    %v1944 = vadd.f32 %v1836, %v1926
    %v1945 = vadd.f32 %v1837, %v1929
    %v1946 = vadd.f32 %v1838, %v1934
    %v1947 = vadd.f32 %v1839, %v1937
    %v1950 = vunpack.c.l.s4 1966171168
    %v1951 = vunpack.c.0.s8 %v1950
    %v1952 = vlaneseq
    %v1953 = vshrl.u32 %v1952, 7
    %v1954 = vsub.s32 %v1951, %v1953
    %v1955 = vrot.slane %v507, %v1954
    %v1956 = vcombine.high %v1955, %v1955
    %v1958 = vunpack.c.l.s4 1966171168
    %v1959 = vunpack.c.0.s8 %v1958
    %v1960 = vlaneseq
    %v1961 = vshrl.u32 %v1960, 7
    %v1962 = vsub.s32 %v1959, %v1961
    %v1963 = vrot.slane %v1955, %v1962
    %v1965 = vunpack.c.l.s4 1966171168
    %v1966 = vunpack.c.0.s8 %v1965
    %v1967 = vlaneseq
    %v1968 = vshrl.u32 %v1967, 7
    %v1969 = vsub.s32 %v1966, %v1968
    %v1970 = vrot.slane %v1956, %v1969
    %v1971 = vlaneseq
    %v1972 = vshrl.u32 %v1971, 7
    %v1973 = vsub.s32 0, %v1972
    %v1974 = vrot.slane %v1963, %v1973
    %v1975 = vlaneseq
    %v1976 = vshrl.u32 %v1975, 7
    %v1977 = vsub.s32 0, %v1976
    %v1978 = vrot.slane %v1970, %v1977
    %v1981 = vadd.f32 %v1940, %v1974
    %v1982 = vadd.f32 %v1941, %v1974
    %v1983 = vadd.f32 %v1942, %v1974
    %v1984 = vadd.f32 %v1943, %v1974
    %v1985 = vadd.f32 %v1944, %v1978
    %v1986 = vadd.f32 %v1945, %v1978
    %v1987 = vadd.f32 %v1946, %v1978
    %v1988 = vadd.f32 %v1947, %v1978
    %v1989 = vtanh.pop %v1981
    %v1990 = vtanh.pop %v1982
    %v1991 = vtanh.pop %v1983
    %v1992 = vtanh.pop %v1984
    %v1993 = vtanh.pop %v1985
    %v1994 = vtanh.pop %v1986
    %v1995 = vtanh.pop %v1987
    %v1996 = vtanh.pop %v1988
    %v1997 = vld [vmem:[#allocation2] sm:$0x1]
    %v1998 = vunpack.c.l.bf16 %v1997
    %v1999 = vlaneseq
    %v2000 = vshrl.u32 %v1999, 7
    %v2001 = vsub.s32 0, %v2000
    %v2002 = vrot.slane %v1998, %v2001
    %v2003 = vmul.f32 %v1989, %v2002
    %v2004 = vmul.f32 %v1990, %v2002
    %v2005 = vmul.f32 %v1991, %v2002
    %v2006 = vmul.f32 %v1992, %v2002
    %v2007 = vmul.f32 %v1993, %v2002
    %v2008 = vmul.f32 %v1994, %v2002
    %v2009 = vmul.f32 %v1995, %v2002
    %v2010 = vmul.f32 %v1996, %v2002
    %v2011 = vsel %vm127, %v2003, 0.0
    %2012 = vadd.xlane.f32.xlu0 %v2011
    %v2013 = vpop.xlane.xlu0 %2012
    %v2014 = vsel %vm127, %v2004, 0.0
    %2015 = vadd.xlane.f32.xlu0 %v2014
    %v2016 = vpop.xlane.xlu0 %2015
    %v2017 = vsel %vm127, %v2005, 0.0
    %2018 = vadd.xlane.f32.xlu0 %v2017
    %v2019 = vpop.xlane.xlu0 %2018
    %v2020 = vsel %vm127, %v2006, 0.0
    %2021 = vadd.xlane.f32.xlu0 %v2020
    %v2022 = vpop.xlane.xlu0 %2021
    %v2023 = vsel %vm127, %v2007, 0.0
    %2024 = vadd.xlane.f32.xlu0 %v2023
    %v2025 = vpop.xlane.xlu0 %2024
    %v2026 = vsel %vm127, %v2008, 0.0
    %2027 = vadd.xlane.f32.xlu0 %v2026
    %v2028 = vpop.xlane.xlu0 %2027
    %v2029 = vsel %vm127, %v2009, 0.0
    %2030 = vadd.xlane.f32.xlu0 %v2029
    %v2031 = vpop.xlane.xlu0 %2030
    %v2032 = vsel %vm127, %v2010, 0.0
    %2033 = vadd.xlane.f32.xlu0 %v2032
    %v2034 = vpop.xlane.xlu0 %2033
    %v2035 = vld [vmem:[%s14] sm:$0xff]
    %v2036 = vld [vmem:[%s14 + $0x8] sm:$0xff]
    %v2037 = vld [vmem:[%s14 + $0x10] sm:$0xff]
    %v2038 = vld [vmem:[%s14 + $0x18] sm:$0xff]
    %v2039 = vld [vmem:[%s14 + $0x20] sm:$0xff]
    %v2040 = vld [vmem:[%s14 + $0x28] sm:$0xff]
    %v2041 = vld [vmem:[%s14 + $0x30] sm:$0xff]
    %v2042 = vld [vmem:[%s14 + $0x38] sm:$0xff]
    %v2043 = vmax.f32 %v2013, %v2019
    %v2044 = vmax.f32 %v2016, %v2022
    %v2045 = vmax.f32 %v2043, %v2044
    %v2046 = vrot.slane %v2045, 4
    %v2047 = vmax.f32 %v2045, %v2046
    %v2048 = vrot.slane %v2047, 2
    %v2049 = vmax.f32 %v2047, %v2048
    %v2050 = vrot.slane %v2049, 1
    %v2051 = vmax.f32 %v2049, %v2050
    %v2052 = vmax.f32 %v2025, %v2031
    %v2053 = vmax.f32 %v2028, %v2034
    %v2054 = vmax.f32 %v2052, %v2053
    %v2055 = vrot.slane %v2054, 4
    %v2056 = vmax.f32 %v2054, %v2055
    %v2057 = vrot.slane %v2056, 2
    %v2058 = vmax.f32 %v2056, %v2057
    %v2059 = vrot.slane %v2058, 1
    %v2060 = vmax.f32 %v2058, %v2059
    %v2061 = vsub.f32 %v2013, %v2051
    %v2062 = vsub.f32 %v2016, %v2051
    %v2063 = vsub.f32 %v2019, %v2051
    %v2064 = vsub.f32 %v2022, %v2051
    %v2065 = vsub.f32 %v2025, %v2060
    %v2066 = vsub.f32 %v2028, %v2060
    %v2067 = vsub.f32 %v2031, %v2060
    %v2068 = vsub.f32 %v2034, %v2060
    %v2069 = vmul.f32 %v2061, 1.442695
    %v2070 = vpow.pop %v2069
    %v2071 = vmul.f32 %v2062, 1.442695
    %v2072 = vpow.pop %v2071
    %v2073 = vmul.f32 %v2063, 1.442695
    %v2074 = vpow.pop %v2073
    %v2075 = vmul.f32 %v2064, 1.442695
    %v2076 = vpow.pop %v2075
    %v2077 = vmul.f32 %v2065, 1.442695
    %v2078 = vpow.pop %v2077
    %v2079 = vmul.f32 %v2066, 1.442695
    %v2080 = vpow.pop %v2079
    %v2081 = vmul.f32 %v2067, 1.442695
    %v2082 = vpow.pop %v2081
    %v2083 = vmul.f32 %v2068, 1.442695
    %v2084 = vpow.pop %v2083
    %v2085 = vmul.f32 %v2070, %v2035
    %v2086 = vmul.f32 %v2072, %v2036
    %v2087 = vmul.f32 %v2074, %v2037
    %v2088 = vmul.f32 %v2076, %v2038
    %v2089 = vmul.f32 %v2078, %v2039
    %v2090 = vmul.f32 %v2080, %v2040
    %v2091 = vmul.f32 %v2082, %v2041
    %v2092 = vmul.f32 %v2084, %v2042
    %vm2093 = vcmask 7168
    %v2094 = vsel %vm2093, %v2085, 0.0
    %v2095 = vsel %vm2093, %v2086, 0.0
    %v2096 = vadd.f32 %v2094, %v2095
    %v2097 = vsel %vm2093, %v2087, 0.0
    %v2098 = vadd.f32 %v2096, %v2097
    %v2099 = vsel %vm2093, %v2088, 0.0
    %v2100 = vadd.f32 %v2098, %v2099
    %v2101 = vrot.slane %v2100, 4
    %v2102 = vadd.f32 %v2100, %v2101
    %v2103 = vrot.slane %v2102, 2
    %v2104 = vadd.f32 %v2102, %v2103
    %v2105 = vrot.slane %v2104, 1
    %v2106 = vadd.f32 %v2104, %v2105
    %v2107 = vsel %vm2093, %v2089, 0.0
    %v2108 = vsel %vm2093, %v2090, 0.0
    %v2109 = vadd.f32 %v2107, %v2108
    %v2110 = vsel %vm2093, %v2091, 0.0
    %v2111 = vadd.f32 %v2109, %v2110
    %v2112 = vsel %vm2093, %v2092, 0.0
    %v2113 = vadd.f32 %v2111, %v2112
    %v2114 = vrot.slane %v2113, 4
    %v2115 = vadd.f32 %v2113, %v2114
    %v2116 = vrot.slane %v2115, 2
    %v2117 = vadd.f32 %v2115, %v2116
    %v2118 = vrot.slane %v2117, 1
    %v2119 = vadd.f32 %v2117, %v2118
    %v2120 = vrcp.pop %v2106
    %v2121 = vrcp.pop %v2119
    %v2122 = vmul.f32 %v2085, %v2120
    %v2123 = vmul.f32 %v2086, %v2120
    %v2124 = vmul.f32 %v2087, %v2120
    %v2125 = vmul.f32 %v2088, %v2120
    %v2126 = vmul.f32 %v2089, %v2121
    %v2127 = vmul.f32 %v2090, %v2121
    %v2128 = vmul.f32 %v2091, %v2121
    %v2129 = vmul.f32 %v2092, %v2121
    %v2130 = vadd.f32 %v2122, 1e-07
    %v2131 = vadd.f32 %v2123, 1e-07
    %v2132 = vadd.f32 %v2124, 1e-07
    %v2133 = vadd.f32 %v2125, 1e-07
    %v2134 = vadd.f32 %v2126, 1e-07
    %v2135 = vadd.f32 %v2127, 1e-07
    %v2136 = vadd.f32 %v2128, 1e-07
    %v2137 = vadd.f32 %v2129, 1e-07
    %v2138 = vunpack.c.l.bf16 %v513
    %v2139 = vunpack.c.l.bf16 %v514
    %v2140 = vunpack.c.l.bf16 %v515
    %v2141 = vunpack.c.l.bf16 %v516
    %v2142 = vunpack.c.l.bf16 %v517
    %v2143 = vunpack.c.l.bf16 %v520
    %v2144 = vunpack.c.l.bf16 %v521
    %v2145 = vunpack.c.l.bf16 %v522
    %v2146 = vunpack.c.l.bf16 %v523
    %v2147 = vunpack.c.l.bf16 %v524
    %2149 = vset.pattern.permute.xlu0 0
    %2150 = vperm.xlu0 %2149, %v2130
    %v2151 = vpop.permute.xlu0 %2150
    %2154 = vset.pattern.permute.xlu0 0
    %2155 = vperm.xlu0 %2154, %v2131
    %v2156 = vpop.permute.xlu0 %2155
    %2159 = vset.pattern.permute.xlu0 0
    %2160 = vperm.xlu0 %2159, %v2132
    %v2161 = vpop.permute.xlu0 %2160
    %2164 = vset.pattern.permute.xlu0 0
    %2165 = vperm.xlu0 %2164, %v2133
    %v2166 = vpop.permute.xlu0 %2165
    %2169 = vset.pattern.permute.xlu0 0
    %2170 = vperm.xlu0 %2169, %v2134
    %v2171 = vpop.permute.xlu0 %2170
    %2174 = vset.pattern.permute.xlu0 0
    %2175 = vperm.xlu0 %2174, %v2135
    %v2176 = vpop.permute.xlu0 %2175
    %2179 = vset.pattern.permute.xlu0 0
    %2180 = vperm.xlu0 %2179, %v2136
    %v2181 = vpop.permute.xlu0 %2180
    %2184 = vset.pattern.permute.xlu0 0
    %2185 = vperm.xlu0 %2184, %v2137
    %v2186 = vpop.permute.xlu0 %2185
    %vm2198 = vcmask 1046528
    %v2199 = vrot.slane %v2138, 1
    %v2200 = vrot.slane %v2139, 1
    %v2201 = vsel %vm2198, %v2199, %v2200
    %v2202 = vrot.slane %v2140, 1
    %v2203 = vsel %vm2198, %v2200, %v2202
    %v2204 = vrot.slane %v2141, 1
    %v2205 = vsel %vm2198, %v2202, %v2204
    %v2206 = vrot.slane %v2142, 1
    %v2207 = vsel %vm2198, %v2204, %v2206
    %v2208 = vrot.slane %v2143, 1
    %v2209 = vrot.slane %v2144, 1
    %v2210 = vsel %vm2198, %v2208, %v2209
    %v2211 = vrot.slane %v2145, 1
    %v2212 = vsel %vm2198, %v2209, %v2211
    %v2213 = vrot.slane %v2146, 1
    %v2214 = vsel %vm2198, %v2211, %v2213
    %v2215 = vrot.slane %v2147, 1
    %v2216 = vsel %vm2198, %v2213, %v2215
    %v2225 = vmul.f32 %v2151, %v2201
    %v2226 = vmul.f32 %v2156, %v2203
    %v2227 = vmul.f32 %v2161, %v2205
    %v2228 = vmul.f32 %v2166, %v2207
    %v2229 = vmul.f32 %v2171, %v2210
    %v2230 = vmul.f32 %v2176, %v2212
    %v2231 = vmul.f32 %v2181, %v2214
    %v2232 = vmul.f32 %v2186, %v2216
    %v2233 = vsel %vm127, %v2225, 0.0
    %v2234 = vsel %vm127, %v2226, 0.0
    %v2235 = vadd.f32 %v2233, %v2234
    %v2236 = vsel %vm127, %v2227, 0.0
    %v2237 = vadd.f32 %v2235, %v2236
    %v2238 = vsel %vm127, %v2228, 0.0
    %v2239 = vadd.f32 %v2237, %v2238
    %v2240 = vrot.slane %v2239, 4
    %v2241 = vadd.f32 %v2239, %v2240
    %v2242 = vrot.slane %v2241, 2
    %v2243 = vadd.f32 %v2241, %v2242
    %v2244 = vrot.slane %v2243, 1
    %v2245 = vadd.f32 %v2243, %v2244
    %v2246 = vsel %vm127, %v2229, 0.0
    %v2247 = vsel %vm127, %v2230, 0.0
    %v2248 = vadd.f32 %v2246, %v2247
    %v2249 = vsel %vm127, %v2231, 0.0
    %v2250 = vadd.f32 %v2248, %v2249
    %v2251 = vsel %vm127, %v2232, 0.0
    %v2252 = vadd.f32 %v2250, %v2251
    %v2253 = vrot.slane %v2252, 4
    %v2254 = vadd.f32 %v2252, %v2253
    %v2255 = vrot.slane %v2254, 2
    %v2256 = vadd.f32 %v2254, %v2255
    %v2257 = vrot.slane %v2256, 1
    %v2258 = vadd.f32 %v2256, %v2257
    %v2259 = vld [vmem:[#allocation5] sm:$0xf]
    %v2260 = vld [vmem:[#allocation5 + $0x4] sm:$0xf]
    %v2261 = vld [vmem:[#allocation5 + $0x8] sm:$0xf]
    %v2262 = vld [vmem:[#allocation5 + $0xc] sm:$0xf]
    %v2263 = vpack.c.bf16 %v2245, %v2245
    %v2264 = vpack.c.bf16 %v2258, %v2258
    %v2265 = vld [vmem:[#allocation7] sm:$0xf]
    %v2266 = vld [vmem:[#allocation7 + $0x4] sm:$0xf]
    %v2267 = vld [vmem:[#allocation7 + $0x8] sm:$0xf]
    %v2268 = vld [vmem:[#allocation7 + $0xc] sm:$0xf]
    %v2271 = vunpack.c.l.b16 %v2263
    %v2272 = vunpack.c.l.b16 %v2264
    %vm2273 = vcmask 1041409
    %v2274 = vsel %vm2273, %v2272, %v2271
    %v2275 = vpack.c.b16 %v2274, %v2274
    %v2280 = vunpack.c.l.b16 %v2265
    %v2281 = vunpack.c.l.b16 %v2266
    %v2282 = vunpack.c.l.b16 %v2267
    %v2283 = vunpack.c.l.b16 %v2268
    %v2284 = vpack.c.b16 %v2281, %v2280
    %v2285 = vpack.c.b16 %v2283, %v2282
    %v2289 = vsel %vm127, %v2275, 0
    %2291 = vmatprep.subr.bf16.mxu0 0
    %2292 = vmatpush1.bf16.msra.mxu0 %v2284
    %2293 = vmatprep.subr.bf16.mxu0 0
    %2294 = vmatpush1.bf16.msra.mxu0 %v2285
    %2295 = vmatprep.subr.bf16.mxu0 0
    %2296 = vmatpush1.bf16.msra.mxu0 0
    %2297 = vmatprep.subr.bf16.mxu0 0
    %2298 = vmatpush1.bf16.msra.mxu0 0
    %2299 = vmatprep.subr.bf16.mxu0 0
    %2300 = vmatpush1.bf16.msra.mxu0 0
    %2301 = vmatprep.subr.bf16.mxu0 0
    %2302 = vmatpush1.bf16.msra.mxu0 0
    %2303 = vmatprep.subr.bf16.mxu0 0
    %2304 = vmatpush1.bf16.msra.mxu0 0
    %2305 = vmatprep.subr.bf16.mxu0 0
    %2306 = vmatpush1.bf16.msra.mxu0 0
    %2307 = vmatprep.subr.bf16.mxu0 0
    %2308 = vmatpush1.bf16.msra.mxu0 0
    %2309 = vmatprep.subr.bf16.mxu0 0
    %2310 = vmatpush1.bf16.msra.mxu0 0
    %2311 = vmatprep.subr.bf16.mxu0 0
    %2312 = vmatpush1.bf16.msra.mxu0 0
    %2313 = vmatprep.subr.bf16.mxu0 0
    %2314 = vmatpush1.bf16.msra.mxu0 0
    %2315 = vmatprep.subr.bf16.mxu0 0
    %2316 = vmatpush1.bf16.msra.mxu0 0
    %2317 = vmatprep.subr.bf16.mxu0 0
    %2318 = vmatpush1.bf16.msra.mxu0 0
    %2319 = vmatprep.subr.bf16.mxu0 0
    %2320 = vmatpush1.bf16.msra.mxu0 0
    %2321 = vmatprep.subr.bf16.mxu0 0
    %2322 = vmatpush1.bf16.msra.mxu0 0
    %2323 = vmatprep.mubr.bf16.mxu0 0
    %2324 = vmatmul.mubr.bf16.gmra.mrb[0].mxu0 %v2289
    %v2325 = vpop.f32.mrb[0].mxu0
    %v2326 = vadd.f32 0.0, %v2325
    %v2327 = vpop.f32.mrb[0].mxu0
    %v2328 = vpop.f32.mrb[0].mxu0
    %v2329 = vpop.f32.mrb[0].mxu0
    %2330 = vdwg.mxu0
    %v2335 = vunpack.c.l.b16 %v2259
    %v2336 = vunpack.c.l.b16 %v2260
    %v2337 = vunpack.c.l.b16 %v2261
    %v2338 = vunpack.c.l.b16 %v2262
    %v2339 = vpack.c.b16 %v2336, %v2335
    %v2340 = vpack.c.b16 %v2338, %v2337
    %2343 = vmatprep.subr.bf16.mxu0 0
    %2344 = vmatpush1.bf16.msra.mxu0 %v2339
    %2345 = vmatprep.subr.bf16.mxu0 0
    %2346 = vmatpush1.bf16.msra.mxu0 %v2340
    %2347 = vmatprep.subr.bf16.mxu0 0
    %2348 = vmatpush1.bf16.msra.mxu0 0
    %2349 = vmatprep.subr.bf16.mxu0 0
    %2350 = vmatpush1.bf16.msra.mxu0 0
    %2351 = vmatprep.subr.bf16.mxu0 0
    %2352 = vmatpush1.bf16.msra.mxu0 0
    %2353 = vmatprep.subr.bf16.mxu0 0
    %2354 = vmatpush1.bf16.msra.mxu0 0
    %2355 = vmatprep.subr.bf16.mxu0 0
    %2356 = vmatpush1.bf16.msra.mxu0 0
    %2357 = vmatprep.subr.bf16.mxu0 0
    %2358 = vmatpush1.bf16.msra.mxu0 0
    %2359 = vmatprep.subr.bf16.mxu0 0
    %2360 = vmatpush1.bf16.msra.mxu0 0
    %2361 = vmatprep.subr.bf16.mxu0 0
    %2362 = vmatpush1.bf16.msra.mxu0 0
    %2363 = vmatprep.subr.bf16.mxu0 0
    %2364 = vmatpush1.bf16.msra.mxu0 0
    %2365 = vmatprep.subr.bf16.mxu0 0
    %2366 = vmatpush1.bf16.msra.mxu0 0
    %2367 = vmatprep.subr.bf16.mxu0 0
    %2368 = vmatpush1.bf16.msra.mxu0 0
    %2369 = vmatprep.subr.bf16.mxu0 0
    %2370 = vmatpush1.bf16.msra.mxu0 0
    %2371 = vmatprep.subr.bf16.mxu0 0
    %2372 = vmatpush1.bf16.msra.mxu0 0
    %2373 = vmatprep.subr.bf16.mxu0 0
    %2374 = vmatpush1.bf16.msra.mxu0 0
    %2375 = vmatprep.mubr.bf16.mxu0 0
    %2376 = vmatmul.mubr.bf16.gmra.mrb[0].mxu0 %v470
    %v2377 = vpop.f32.mrb[0].mxu0
    %v2378 = vadd.f32 %v2326, %v2377
    %v2379 = vpop.f32.mrb[0].mxu0
    %v2380 = vpop.f32.mrb[0].mxu0
    %v2381 = vpop.f32.mrb[0].mxu0
    %2382 = vdwg.mxu0
    %v2383 = vld [vmem:[%s17] sm:$0x1]
    %v2385 = vlaneseq
    %v2386 = vshrl.u32 %v2385, 7
    %v2387 = vsub.s32 0, %v2386
    %v2388 = vrot.slane %v2383, %v2387
    %v2390 = vadd.f32 %v2378, %v2388
    %2391 = vst [vmem:[#allocation8] sm:$0x3] %v2390
    // Predicated region
    $region86: #{decoder_step.1} parent=1 // pred_check
      _
    $region87: #{decoder_step.1} parent=1 // pred_check_branch
      %2393 = sbr.rel (0) target = $region89
    $region88: #{decoder_step.1} parent=1 // pred_region
      %s2395 = ssub.s32 32, 32
      %2396 = vsyncadd [#allocation4], %s2395
      %s2398 = sshll.u32 [#allocation8], 4
      %s2399 = int_to_ptr.vmem [resolvable:$true] %s2398
      %2401 = dma.vmem_to_hbm [thread:$0]  %s2399, 32, %s18, [#allocation4]
    $region89: #{decoder_step.1} parent=1 // pred_fallthru
      _
    // Predicated region
    $region90: #{decoder_step.1} parent=1 // pred_check
      _
    $region91: #{decoder_step.1} parent=1 // pred_check_branch
      %2403 = sbr.rel (0) target = $region93
    $region92: #{decoder_step.1} parent=1 // pred_region
      _
    $region93: #{decoder_step.1} parent=1 // pred_fallthru
      _
    // Predicated region
    $region94: #{decoder_step.1} parent=1 // pred_check
      _
    $region95: #{decoder_step.1} parent=1 // pred_check_branch
      %2405 = sbr.rel (0) target = $region97
    $region96: #{decoder_step.1} parent=1 // pred_region
      %2406 = dma.done [#allocation4], 32
    $region97: #{decoder_step.1} parent=1 // pred_fallthru
      _
    // Predicated region
    $region98: #{decoder_step.1} parent=1 // pred_check
      _
    $region99: #{decoder_step.1} parent=1 // pred_check_branch
      %2408 = sbr.rel (0) target = $region101
    $region100: #{decoder_step.1} parent=1 // pred_region
      _
    $region101: #{decoder_step.1} parent=1 // pred_fallthru
      _
    %2409 = vsyncpa [#allocation3], 1
    %2410 = vsyncpa [#allocation6], 1
    %2411 = vsyncpa [#allocation4], 1

</llo_original>
